<compile_context>
chip_gen: v6e
topology: v6e:2x2x1
jax: 0.10.0
libtpu: 0.0.40
codegen_flags: <defaults>
</compile_context>

<pallas_src>
import jax
import jax.numpy as jnp
from jax.experimental import pallas as pl
from jax.experimental.pallas import tpu as pltpu

LEAKY_SLOPE = 0.01  # nn.LeakyReLU default negative_slope


def _leaky(x):
    return jnp.where(x > 0, x, LEAKY_SLOPE * x)


# ----------------------------- Pallas kernels ------------------------------

def _conv1_kernel(p_ref, w_ref, b_ref, o_ref):
    """Fused Conv2d(4->16, k=3, s=2, p=1) + MaxPool2d(2,2) + bias + LeakyReLU.

    p_ref : (36, 4*M) bf16  im2col patches; the 4 pool-window slots concatenated
                            along the lane axis -> one MXU push.
    w_ref : (16, 36)  bf16  conv weight (PyTorch (16,4,3,3) row-major flatten).
    b_ref : (16, 1)   f32   conv bias.
    o_ref : (16, M)   bf16  pooled + activated output, M = B*8*8 (lane-dense).
    """
    M = o_ref.shape[1]
    y = jnp.dot(w_ref[...], p_ref[...], preferred_element_type=jnp.float32)  # (16, 4M)
    m = y[:, 0:M]
    for q in range(1, 4):                            # MaxPool2d(2,2): max over slots
        m = jnp.maximum(m, y[:, q * M:(q + 1) * M])
    m = m + b_ref[...]                               # bias once, after the max
    o_ref[...] = _leaky(m).astype(o_ref.dtype)


def _conv2_fc_kernel(p2_ref, as_ref, w2_ref, b2_ref, w1x_ref, w1as_ref, b1_ref,
                     w2f_ref, b2f_ref, w3f_ref, b3f_ref, wsf_ref, bsf_ref,
                     wo_ref, bo_ref, o_ref):
    """conv2 block + flatten + torch.cat + Fc1 -> Fc2 -> Fc3 -> fcs -> relu -> out.

    p2_ref : (4, B, 576) bf16  conv2 im2col, one slab per 2x2 pool-window slot;
                               columns ordered (pool_pixel p)*144 + tap k.
    w2_ref : (576, 128)  bf16  block-diagonal conv2 weight (4 copies of (144,32))
                               so the matmul result lanes are p*32 + channel,
                               i.e. exactly the flattened NCHW conv2 output.
    b2_ref : (1, 128)    f32   conv2 bias tiled per pool pixel.
    as_ref : (B, a+s)    bf16  [a | s_pos] (the non-conv part of torch.cat).
    w1x/w1as/b1        : Fc1 split into the flat-conv rows (re-ordered to the
                         lane layout above) and the [a|s_pos] rows.
    remaining refs     : Fc2 / Fc3 / fcs / out weights (bf16) + biases (f32).
    """
    # conv2 matmul + MaxPool2d(2,2) over the 4 window slots + bias + LeakyReLU
    w2 = w2_ref[...]
    y = jnp.dot(p2_ref[0], w2, preferred_element_type=jnp.float32)
    for q in range(1, 4):
        y = jnp.maximum(y, jnp.dot(p2_ref[q], w2, preferred_element_type=jnp.float32))
    y = _leaky(y + b2_ref[...])                      # (B, 128) == x.reshape(B, -1)

    # Fc1 over torch.cat((a, flat, s_pos), 1), then LeakyReLU
    h = (jnp.dot(y.astype(jnp.bfloat16), w1x_ref[...], preferred_element_type=jnp.float32)
         + jnp.dot(as_ref[...], w1as_ref[...], preferred_element_type=jnp.float32)
         + b1_ref[...])
    h = _leaky(h)
    # Fc2 + LeakyReLU
    h = _leaky(jnp.dot(h.astype(jnp.bfloat16), w2f_ref[...],
                       preferred_element_type=jnp.float32) + b2f_ref[...])
    # Fc3 (no activation between Fc3 and fcs, per the PyTorch module)
    h = jnp.dot(h.astype(jnp.bfloat16), w3f_ref[...],
                preferred_element_type=jnp.float32) + b3f_ref[...]
    # fcs + relu
    h = jnp.dot(h.astype(jnp.bfloat16), wsf_ref[...],
                preferred_element_type=jnp.float32) + bsf_ref[...]
    h = jnp.maximum(h, 0.0)
    # out
    h = jnp.dot(h.astype(jnp.bfloat16), wo_ref[...],
                preferred_element_type=jnp.float32) + bo_ref[...]
    o_ref[...] = h.astype(o_ref.dtype)               # (B, 1)


# ------------------------------ wrappers ------------------------------------

def _full_spec(arr):
    zeros = (0,) * arr.ndim
    return pl.BlockSpec(arr.shape, lambda i: zeros)


def conv1_block(s_img, w, b):
    """(B, 4, 32, 32) f32 -> (16, B*64) bf16, columns ordered (b, ph, pw)."""
    B = s_img.shape[0]
    M = B * 8 * 8
    # TODO(synk): the im2col patch gather (strided window extraction across the
    # sublane/lane boundary) stays in XLA; it has no clean Mosaic lowering here.
    fp = jax.lax.conv_general_dilated_patches(
        s_img, filter_shape=(3, 3), window_strides=(2, 2), padding=((1, 1), (1, 1)))
    # (B, 36, 16, 16); feature dim ordered (c, kh, kw) == torch weight flatten.
    fp = fp.reshape(B, 36, 8, 2, 8, 2)                          # (b, k, ph, qh, pw, qw)
    patches = jnp.transpose(fp, (1, 3, 5, 0, 2, 4)).reshape(36, 4 * M)
    patches = patches.astype(jnp.bfloat16)                      # slot-major columns

    return pl.pallas_call(
        _conv1_kernel,
        out_shape=jax.ShapeDtypeStruct((16, M), jnp.bfloat16),
        grid=(1,),
        in_specs=[pl.BlockSpec((36, 4 * M), lambda i: (0, 0)),
                  pl.BlockSpec((16, 36), lambda i: (0, 0)),
                  pl.BlockSpec((16, 1), lambda i: (0, 0))],
        out_specs=pl.BlockSpec((16, M), lambda i: (0, 0)),
        compiler_params=pltpu.CompilerParams(dimension_semantics=("arbitrary",)),
    )(patches, w, b)


def conv2_fc_stack(p2, as_in, p):
    """Single fused kernel: conv2 block + flatten + cat + full FC stack."""
    B = as_in.shape[0]
    args = (p2, as_in,
            p["conv2_w"], p["conv2_b"],
            p["fc1x_w"], p["fc1as_w"], p["fc1_b"],
            p["fc2_w"], p["fc2_b"],
            p["fc3_w"], p["fc3_b"],
            p["fcs_w"], p["fcs_b"],
            p["out_w"], p["out_b"])
    return pl.pallas_call(
        _conv2_fc_kernel,
        out_shape=jax.ShapeDtypeStruct((B, 1), jnp.float32),
        grid=(1,),
        in_specs=[_full_spec(x) for x in args],
        out_specs=pl.BlockSpec((B, 1), lambda i: (0, 0)),
        compiler_params=pltpu.CompilerParams(dimension_semantics=("arbitrary",)),
    )(*args)


# ---------------------------- parameters / model ----------------------------

def init_params(key, s_dim, a_dim):
    """Synthetic init mirroring CNet (weights ~ N(0, 0.5), PyTorch-default biases).

    Weights are stored pre-reshaped / pre-reordered ONCE here into the layouts
    the kernels consume (block-diagonal conv2, split/reordered Fc1, all matmul
    weights bf16, biases f32) — never inside the jitted forward.
    """
    ks = jax.random.split(key, 16)

    def normal(k, shape):
        return 0.5 * jax.random.normal(k, shape, jnp.float32)

    def bias(k, fan_in, shape):
        bound = 1.0 / jnp.sqrt(float(fan_in))
        return jax.random.uniform(k, shape, jnp.float32, -bound, bound)

    # conv1: torch (16, 4, 3, 3) -> (16, 36)
    conv1_w = normal(ks[0], (16, 4, 3, 3)).reshape(16, 36).astype(jnp.bfloat16)
    conv1_b = bias(ks[1], 4 * 9, (16, 1))

    # conv2: torch (32, 16, 3, 3) -> block-diagonal (4*144, 4*32) so the matmul
    # result lanes are (pool pixel p)*32 + channel c == flattened NCHW output.
    w2t = normal(ks[2], (32, 16, 3, 3)).reshape(32, 144).T          # (144, 32)
    w2big = jnp.zeros((4 * 144, 4 * 32), jnp.float32)
    for p in range(4):
        w2big = w2big.at[p * 144:(p + 1) * 144, p * 32:(p + 1) * 32].set(w2t)
    conv2_w = w2big.astype(jnp.bfloat16)                             # (576, 128)
    conv2_b = jnp.tile(bias(ks[3], 16 * 9, (1, 32)), (1, 4))         # (1, 128)

    # Fc1: torch (512, 132) -> (132, 512); split rows into [a | flat | s_pos];
    # reorder the flat rows from torch order (c*4 + p) to lane order (p*32 + c).
    w1 = normal(ks[4], (512, 132)).T                                 # (132, 512)
    w1x = w1[a_dim:a_dim + 128]
    w1x = w1x.reshape(32, 4, 512).transpose(1, 0, 2).reshape(128, 512)
    w1as = jnp.concatenate([w1[:a_dim], w1[a_dim + 128:]], axis=0)   # (a+s_pos, 512)

    return {
        "conv1_w": conv1_w, "conv1_b": conv1_b,
        "conv2_w": conv2_w, "conv2_b": conv2_b,
        "fc1x_w": w1x.astype(jnp.bfloat16),
        "fc1as_w": w1as.astype(jnp.bfloat16),
        "fc1_b": bias(ks[5], 132, (1, 512)),
        "fc2_w": normal(ks[6], (128, 512)).T.astype(jnp.bfloat16),
        "fc2_b": bias(ks[7], 512, (1, 128)),
        "fc3_w": normal(ks[8], (s_dim, 128)).T.astype(jnp.bfloat16),
        "fc3_b": bias(ks[9], 128, (1, s_dim)),
        "fcs_w": normal(ks[10], (30, s_dim)).T.astype(jnp.bfloat16),
        "fcs_b": bias(ks[11], s_dim, (1, 30)),
        # fca is created in CNet.__init__ but never used in forward().
        "fca_w": normal(ks[12], (30, a_dim)).T.astype(jnp.bfloat16),
        "fca_b": bias(ks[13], a_dim, (1, 30)),
        "out_w": normal(ks[14], (1, 30)).T.astype(jnp.bfloat16),
        "out_b": bias(ks[15], 30, (1, 1)),
    }


def cnet_forward(params, s_img, s_pos, a):
    B = s_img.shape[0]
    # conv1 block: one fused Pallas kernel, bf16 channel-major output (16, B*64)
    x1 = conv1_block(s_img, params["conv1_w"], params["conv1_b"])
    # conv2 im2col (XLA glue): back to NCHW, one patch-extraction op
    x1 = jnp.transpose(x1.reshape(16, B, 8, 8), (1, 0, 2, 3))        # (B, 16, 8, 8)
    fp2 = jax.lax.conv_general_dilated_patches(
        x1, filter_shape=(3, 3), window_strides=(2, 2), padding=((1, 1), (1, 1)))
    # (B, 144, 4, 4) -> (slot q, b, pool-pixel p * 144 + tap k)
    fp2 = fp2.reshape(B, 144, 2, 2, 2, 2)                            # (b, k, ph, qh, pw, qw)
    p2 = jnp.transpose(fp2, (3, 5, 0, 2, 4, 1)).reshape(4, B, 4 * 144)
    p2 = p2.astype(jnp.bfloat16)
    # the non-conv part of torch.cat((a, flat, s_pos), 1)
    as_in = jnp.concatenate([a, s_pos], axis=1).astype(jnp.bfloat16)
    # conv2 + flatten + cat + Fc1..out: one fused Pallas kernel
    return conv2_fc_stack(p2, as_in, params)                         # (B, 1)


if __name__ == "__main__":
    # Fc1 in_features = 132 = a_dim + 32*2*2 + s_pos_dim  =>  32x32 input image,
    # s_dim = 2, a_dim = 2.
    s_dim, a_dim, B = 2, 2, 2
    key = jax.random.PRNGKey(0)
    kp, ki, ksp, ka = jax.random.split(key, 4)
    params = init_params(kp, s_dim, a_dim)
    s_img = jax.random.normal(ki, (B, 4, 32, 32), jnp.float32)
    s_pos = jax.random.normal(ksp, (B, s_dim), jnp.float32)
    a = jax.random.normal(ka, (B, a_dim), jnp.float32)

    out = jax.jit(cnet_forward)(params, s_img, s_pos, a)
    out = jax.block_until_ready(out)
    assert out.shape == (B, 1) and out.dtype == jnp.float32
    print("KERNEL_OK")
</pallas_src>

<mosaic_0001>
module attributes {stable_mosaic.version = 11 : i64} {
  func.func @_conv1_kernel(%arg0: i32, %arg1: memref<36x512xbf16, #tpu.memory_space<vmem>>, %arg2: memref<16x36xbf16, #tpu.memory_space<vmem>>, %arg3: memref<16x1xf32, #tpu.memory_space<vmem>>, %arg4: memref<16x128xbf16, #tpu.memory_space<vmem>>) attributes {dimension_semantics = [#tpu.dimension_semantics<arbitrary>], iteration_bounds = array<i64: 1>, scalar_prefetch = 0 : i64, scratch_operands = 0 : i64, tpu.core_type = #tpu.core_type<tc>, window_params = [{pipeline_mode = #tpu.pipeline_mode<synchronous>, transform_indices = @transform_0, window_bounds = array<i64: 36, 512>}, {pipeline_mode = #tpu.pipeline_mode<synchronous>, transform_indices = @transform_1, window_bounds = array<i64: 16, 36>}, {pipeline_mode = #tpu.pipeline_mode<synchronous>, transform_indices = @transform_2, window_bounds = array<i64: 16, 1>}, {pipeline_mode = #tpu.pipeline_mode<synchronous>, transform_indices = @transform_3, window_bounds = array<i64: 16, 128>}]} {
    %c0 = arith.constant 0 : index
    %c0_0 = arith.constant 0 : index
    %0 = vector.load %arg2[%c0, %c0_0] : memref<16x36xbf16, #tpu.memory_space<vmem>>, vector<16x36xbf16>
    %c0_1 = arith.constant 0 : index
    %c0_2 = arith.constant 0 : index
    %1 = vector.load %arg1[%c0_1, %c0_2] : memref<36x512xbf16, #tpu.memory_space<vmem>>, vector<36x512xbf16>
    %cst = arith.constant dense<0.000000e+00> : vector<16x512xf32>
    %2 = tpu.matmul %0, %1, %cst {dimension_numbers = #tpu.dot_dimension_numbers<[1], [0], [0], [1], [0, 0, 1, 1], [], []>} : vector<16x36xbf16>, vector<36x512xbf16>, vector<16x512xf32> -> vector<16x512xf32>
    %3 = vector.extract_strided_slice %2 {offsets = [0, 0], sizes = [16, 128], strides = [1, 1]} : vector<16x512xf32> to vector<16x128xf32>
    %4 = vector.extract_strided_slice %2 {offsets = [0, 128], sizes = [16, 128], strides = [1, 1]} : vector<16x512xf32> to vector<16x128xf32>
    %5 = arith.maximumf %3, %4 : vector<16x128xf32>
    %6 = vector.extract_strided_slice %2 {offsets = [0, 256], sizes = [16, 128], strides = [1, 1]} : vector<16x512xf32> to vector<16x128xf32>
    %7 = arith.maximumf %5, %6 : vector<16x128xf32>
    %8 = vector.extract_strided_slice %2 {offsets = [0, 384], sizes = [16, 128], strides = [1, 1]} : vector<16x512xf32> to vector<16x128xf32>
    %9 = arith.maximumf %7, %8 : vector<16x128xf32>
    %c0_3 = arith.constant 0 : index
    %c0_4 = arith.constant 0 : index
    %10 = vector.load %arg3[%c0_3, %c0_4] : memref<16x1xf32, #tpu.memory_space<vmem>>, vector<16x1xf32>
    %11 = vector.broadcast %10 : vector<16x1xf32> to vector<16x128xf32>
    %12 = arith.addf %9, %11 : vector<16x128xf32>
    %cst_5 = arith.constant 0.000000e+00 : f32
    %13 = vector.broadcast %cst_5 : f32 to vector<16x128xf32>
    %14 = arith.cmpf ogt, %12, %13 : vector<16x128xf32>
    %cst_6 = arith.constant 0.00999999977 : f32
    %15 = vector.broadcast %cst_6 : f32 to vector<16x128xf32>
    %16 = arith.mulf %15, %12 : vector<16x128xf32>
    %17 = arith.select %14, %12, %16 : vector<16x128xi1>, vector<16x128xf32>
    %18 = arith.truncf %17 : vector<16x128xf32> to vector<16x128xbf16>
    %c0_7 = arith.constant 0 : index
    %c0_8 = arith.constant 0 : index
    %19 = vector.load %arg4[%c0_7, %c0_8] : memref<16x128xbf16, #tpu.memory_space<vmem>>, vector<16x128xbf16>
    tpu.vector_store %arg4[%c0_7, %c0_8], %18 {strides = array<i32>} : memref<16x128xbf16, #tpu.memory_space<vmem>>, vector<16x128xbf16>,
    return
  }
  func.func @transform_0(%arg0: i32) -> (i32, i32) {
    %c0_i32 = arith.constant 0 : i32
    %c0_i32_0 = arith.constant 0 : i32
    %c0_i32_1 = arith.constant 0 : i32
    return %c0_i32, %c0_i32_0 : i32, i32
  }
  func.func @transform_1(%arg0: i32) -> (i32, i32) {
    %c0_i32 = arith.constant 0 : i32
    %c0_i32_0 = arith.constant 0 : i32
    %c0_i32_1 = arith.constant 0 : i32
    return %c0_i32, %c0_i32_0 : i32, i32
  }
  func.func @transform_2(%arg0: i32) -> (i32, i32) {
    %c0_i32 = arith.constant 0 : i32
    %c0_i32_0 = arith.constant 0 : i32
    %c0_i32_1 = arith.constant 0 : i32
    return %c0_i32, %c0_i32_0 : i32, i32
  }
  func.func @transform_3(%arg0: i32) -> (i32, i32) {
    %c0_i32 = arith.constant 0 : i32
    %c0_i32_0 = arith.constant 0 : i32
    %c0_i32_1 = arith.constant 0 : i32
    return %c0_i32, %c0_i32_0 : i32, i32
  }
}

module attributes {stable_mosaic.version = 11 : i64} {
  func.func @_conv2_fc_kernel(%arg0: i32, %arg1: memref<4x2x576xbf16, #tpu.memory_space<vmem>>, %arg2: memref<2x4xbf16, #tpu.memory_space<vmem>>, %arg3: memref<576x128xbf16, #tpu.memory_space<vmem>>, %arg4: memref<1x128xf32, #tpu.memory_space<vmem>>, %arg5: memref<128x512xbf16, #tpu.memory_space<vmem>>, %arg6: memref<4x512xbf16, #tpu.memory_space<vmem>>, %arg7: memref<1x512xf32, #tpu.memory_space<vmem>>, %arg8: memref<512x128xbf16, #tpu.memory_space<vmem>>, %arg9: memref<1x128xf32, #tpu.memory_space<vmem>>, %arg10: memref<128x2xbf16, #tpu.memory_space<vmem>>, %arg11: memref<1x2xf32, #tpu.memory_space<vmem>>, %arg12: memref<2x30xbf16, #tpu.memory_space<vmem>>, %arg13: memref<1x30xf32, #tpu.memory_space<vmem>>, %arg14: memref<30x1xbf16, #tpu.memory_space<vmem>>, %arg15: memref<1x1xf32, #tpu.memory_space<vmem>>, %arg16: memref<2x1xf32, #tpu.memory_space<vmem>>) attributes {dimension_semantics = [#tpu.dimension_semantics<arbitrary>], iteration_bounds = array<i64: 1>, scalar_prefetch = 0 : i64, scratch_operands = 0 : i64, tpu.core_type = #tpu.core_type<tc>, window_params = [{pipeline_mode = #tpu.pipeline_mode<synchronous>, transform_indices = @transform_0, window_bounds = array<i64: 4, 2, 576>}, {pipeline_mode = #tpu.pipeline_mode<synchronous>, transform_indices = @transform_1, window_bounds = array<i64: 2, 4>}, {pipeline_mode = #tpu.pipeline_mode<synchronous>, transform_indices = @transform_2, window_bounds = array<i64: 576, 128>}, {pipeline_mode = #tpu.pipeline_mode<synchronous>, transform_indices = @transform_3, window_bounds = array<i64: 1, 128>}, {pipeline_mode = #tpu.pipeline_mode<synchronous>, transform_indices = @transform_4, window_bounds = array<i64: 128, 512>}, {pipeline_mode = #tpu.pipeline_mode<synchronous>, transform_indices = @transform_5, window_bounds = array<i64: 4, 512>}, {pipeline_mode = #tpu.pipeline_mode<synchronous>, transform_indices = @transform_6, window_bounds = array<i64: 1, 512>}, {pipeline_mode = #tpu.pipeline_mode<synchronous>, transform_indices = @transform_7, window_bounds = array<i64: 512, 128>}, {pipeline_mode = #tpu.pipeline_mode<synchronous>, transform_indices = @transform_8, window_bounds = array<i64: 1, 128>}, {pipeline_mode = #tpu.pipeline_mode<synchronous>, transform_indices = @transform_9, window_bounds = array<i64: 128, 2>}, {pipeline_mode = #tpu.pipeline_mode<synchronous>, transform_indices = @transform_10, window_bounds = array<i64: 1, 2>}, {pipeline_mode = #tpu.pipeline_mode<synchronous>, transform_indices = @transform_11, window_bounds = array<i64: 2, 30>}, {pipeline_mode = #tpu.pipeline_mode<synchronous>, transform_indices = @transform_12, window_bounds = array<i64: 1, 30>}, {pipeline_mode = #tpu.pipeline_mode<synchronous>, transform_indices = @transform_13, window_bounds = array<i64: 30, 1>}, {pipeline_mode = #tpu.pipeline_mode<synchronous>, transform_indices = @transform_14, window_bounds = array<i64: 1, 1>}, {pipeline_mode = #tpu.pipeline_mode<synchronous>, transform_indices = @transform_15, window_bounds = array<i64: 2, 1>}]} {
    %c0 = arith.constant 0 : index
    %c0_0 = arith.constant 0 : index
    %0 = vector.load %arg3[%c0, %c0_0] : memref<576x128xbf16, #tpu.memory_space<vmem>>, vector<576x128xbf16>
    %c0_1 = arith.constant 0 : index
    %c0_2 = arith.constant 0 : index
    %c0_3 = arith.constant 0 : index
    %1 = vector.load %arg1[%c0_1, %c0_2, %c0_3] : memref<4x2x576xbf16, #tpu.memory_space<vmem>>, vector<1x2x576xbf16>
    %2 = vector.shape_cast %1 : vector<1x2x576xbf16> to vector<2x576xbf16>
    %cst = arith.constant dense<0.000000e+00> : vector<2x128xf32>
    %3 = tpu.matmul %2, %0, %cst {dimension_numbers = #tpu.dot_dimension_numbers<[1], [0], [0], [1], [0, 0, 1, 1], [], []>} : vector<2x576xbf16>, vector<576x128xbf16>, vector<2x128xf32> -> vector<2x128xf32>
    %c1 = arith.constant 1 : index
    %c0_4 = arith.constant 0 : index
    %c0_5 = arith.constant 0 : index
    %4 = vector.load %arg1[%c1, %c0_4, %c0_5] : memref<4x2x576xbf16, #tpu.memory_space<vmem>>, vector<1x2x576xbf16>
    %5 = vector.shape_cast %4 : vector<1x2x576xbf16> to vector<2x576xbf16>
    %cst_6 = arith.constant dense<0.000000e+00> : vector<2x128xf32>
    %6 = tpu.matmul %5, %0, %cst_6 {dimension_numbers = #tpu.dot_dimension_numbers<[1], [0], [0], [1], [0, 0, 1, 1], [], []>} : vector<2x576xbf16>, vector<576x128xbf16>, vector<2x128xf32> -> vector<2x128xf32>
    %7 = arith.maximumf %3, %6 : vector<2x128xf32>
    %c2 = arith.constant 2 : index
    %c0_7 = arith.constant 0 : index
    %c0_8 = arith.constant 0 : index
    %8 = vector.load %arg1[%c2, %c0_7, %c0_8] : memref<4x2x576xbf16, #tpu.memory_space<vmem>>, vector<1x2x576xbf16>
    %9 = vector.shape_cast %8 : vector<1x2x576xbf16> to vector<2x576xbf16>
    %cst_9 = arith.constant dense<0.000000e+00> : vector<2x128xf32>
    %10 = tpu.matmul %9, %0, %cst_9 {dimension_numbers = #tpu.dot_dimension_numbers<[1], [0], [0], [1], [0, 0, 1, 1], [], []>} : vector<2x576xbf16>, vector<576x128xbf16>, vector<2x128xf32> -> vector<2x128xf32>
    %11 = arith.maximumf %7, %10 : vector<2x128xf32>
    %c3 = arith.constant 3 : index
    %c0_10 = arith.constant 0 : index
    %c0_11 = arith.constant 0 : index
    %12 = vector.load %arg1[%c3, %c0_10, %c0_11] : memref<4x2x576xbf16, #tpu.memory_space<vmem>>, vector<1x2x576xbf16>
    %13 = vector.shape_cast %12 : vector<1x2x576xbf16> to vector<2x576xbf16>
    %cst_12 = arith.constant dense<0.000000e+00> : vector<2x128xf32>
    %14 = tpu.matmul %13, %0, %cst_12 {dimension_numbers = #tpu.dot_dimension_numbers<[1], [0], [0], [1], [0, 0, 1, 1], [], []>} : vector<2x576xbf16>, vector<576x128xbf16>, vector<2x128xf32> -> vector<2x128xf32>
    %15 = arith.maximumf %11, %14 : vector<2x128xf32>
    %c0_13 = arith.constant 0 : index
    %c0_14 = arith.constant 0 : index
    %16 = vector.load %arg4[%c0_13, %c0_14] : memref<1x128xf32, #tpu.memory_space<vmem>>, vector<1x128xf32>
    %17 = vector.broadcast %16 : vector<1x128xf32> to vector<2x128xf32>
    %18 = arith.addf %15, %17 : vector<2x128xf32>
    %cst_15 = arith.constant 0.000000e+00 : f32
    %19 = vector.broadcast %cst_15 : f32 to vector<2x128xf32>
    %20 = arith.cmpf ogt, %18, %19 : vector<2x128xf32>
    %cst_16 = arith.constant 0.00999999977 : f32
    %21 = vector.broadcast %cst_16 : f32 to vector<2x128xf32>
    %22 = arith.mulf %21, %18 : vector<2x128xf32>
    %23 = arith.select %20, %18, %22 : vector<2x128xi1>, vector<2x128xf32>
    %24 = arith.truncf %23 : vector<2x128xf32> to vector<2x128xbf16>
    %c0_17 = arith.constant 0 : index
    %c0_18 = arith.constant 0 : index
    %25 = vector.load %arg5[%c0_17, %c0_18] : memref<128x512xbf16, #tpu.memory_space<vmem>>, vector<128x512xbf16>
    %cst_19 = arith.constant dense<0.000000e+00> : vector<2x512xf32>
    %26 = tpu.matmul %24, %25, %cst_19 {dimension_numbers = #tpu.dot_dimension_numbers<[1], [0], [0], [1], [0, 0, 1, 1], [], []>} : vector<2x128xbf16>, vector<128x512xbf16>, vector<2x512xf32> -> vector<2x512xf32>
    %c0_20 = arith.constant 0 : index
    %c0_21 = arith.constant 0 : index
    %27 = vector.load %arg2[%c0_20, %c0_21] : memref<2x4xbf16, #tpu.memory_space<vmem>>, vector<2x4xbf16>
    %c0_22 = arith.constant 0 : index
    %c0_23 = arith.constant 0 : index
    %28 = vector.load %arg6[%c0_22, %c0_23] : memref<4x512xbf16, #tpu.memory_space<vmem>>, vector<4x512xbf16>
    %cst_24 = arith.constant dense<0.000000e+00> : vector<2x512xf32>
    %29 = tpu.matmul %27, %28, %cst_24 {dimension_numbers = #tpu.dot_dimension_numbers<[1], [0], [0], [1], [0, 0, 1, 1], [], []>} : vector<2x4xbf16>, vector<4x512xbf16>, vector<2x512xf32> -> vector<2x512xf32>
    %30 = arith.addf %26, %29 : vector<2x512xf32>
    %c0_25 = arith.constant 0 : index
    %c0_26 = arith.constant 0 : index
    %31 = vector.load %arg7[%c0_25, %c0_26] : memref<1x512xf32, #tpu.memory_space<vmem>>, vector<1x512xf32>
    %32 = vector.broadcast %31 : vector<1x512xf32> to vector<2x512xf32>
    %33 = arith.addf %30, %32 : vector<2x512xf32>
    %cst_27 = arith.constant 0.000000e+00 : f32
    %34 = vector.broadcast %cst_27 : f32 to vector<2x512xf32>
    %35 = arith.cmpf ogt, %33, %34 : vector<2x512xf32>
    %cst_28 = arith.constant 0.00999999977 : f32
    %36 = vector.broadcast %cst_28 : f32 to vector<2x512xf32>
    %37 = arith.mulf %36, %33 : vector<2x512xf32>
    %38 = arith.select %35, %33, %37 : vector<2x512xi1>, vector<2x512xf32>
    %39 = arith.truncf %38 : vector<2x512xf32> to vector<2x512xbf16>
    %c0_29 = arith.constant 0 : index
    %c0_30 = arith.constant 0 : index
    %40 = vector.load %arg8[%c0_29, %c0_30] : memref<512x128xbf16, #tpu.memory_space<vmem>>, vector<512x128xbf16>
    %cst_31 = arith.constant dense<0.000000e+00> : vector<2x128xf32>
    %41 = tpu.matmul %39, %40, %cst_31 {dimension_numbers = #tpu.dot_dimension_numbers<[1], [0], [0], [1], [0, 0, 1, 1], [], []>} : vector<2x512xbf16>, vector<512x128xbf16>, vector<2x128xf32> -> vector<2x128xf32>
    %c0_32 = arith.constant 0 : index
    %c0_33 = arith.constant 0 : index
    %42 = vector.load %arg9[%c0_32, %c0_33] : memref<1x128xf32, #tpu.memory_space<vmem>>, vector<1x128xf32>
    %43 = vector.broadcast %42 : vector<1x128xf32> to vector<2x128xf32>
    %44 = arith.addf %41, %43 : vector<2x128xf32>
    %cst_34 = arith.constant 0.000000e+00 : f32
    %45 = vector.broadcast %cst_34 : f32 to vector<2x128xf32>
    %46 = arith.cmpf ogt, %44, %45 : vector<2x128xf32>
    %cst_35 = arith.constant 0.00999999977 : f32
    %47 = vector.broadcast %cst_35 : f32 to vector<2x128xf32>
    %48 = arith.mulf %47, %44 : vector<2x128xf32>
    %49 = arith.select %46, %44, %48 : vector<2x128xi1>, vector<2x128xf32>
    %50 = arith.truncf %49 : vector<2x128xf32> to vector<2x128xbf16>
    %c0_36 = arith.constant 0 : index
    %c0_37 = arith.constant 0 : index
    %51 = vector.load %arg10[%c0_36, %c0_37] : memref<128x2xbf16, #tpu.memory_space<vmem>>, vector<128x2xbf16>
    %cst_38 = arith.constant dense<0.000000e+00> : vector<2x2xf32>
    %52 = tpu.matmul %50, %51, %cst_38 {dimension_numbers = #tpu.dot_dimension_numbers<[1], [0], [0], [1], [0, 0, 1, 1], [], []>} : vector<2x128xbf16>, vector<128x2xbf16>, vector<2x2xf32> -> vector<2x2xf32>
    %c0_39 = arith.constant 0 : index
    %c0_40 = arith.constant 0 : index
    %53 = vector.load %arg11[%c0_39, %c0_40] : memref<1x2xf32, #tpu.memory_space<vmem>>, vector<1x2xf32>
    %54 = vector.broadcast %53 : vector<1x2xf32> to vector<2x2xf32>
    %55 = arith.addf %52, %54 : vector<2x2xf32>
    %56 = arith.truncf %55 : vector<2x2xf32> to vector<2x2xbf16>
    %c0_41 = arith.constant 0 : index
    %c0_42 = arith.constant 0 : index
    %57 = vector.load %arg12[%c0_41, %c0_42] : memref<2x30xbf16, #tpu.memory_space<vmem>>, vector<2x30xbf16>
    %cst_43 = arith.constant dense<0.000000e+00> : vector<2x30xf32>
    %58 = tpu.matmul %56, %57, %cst_43 {dimension_numbers = #tpu.dot_dimension_numbers<[1], [0], [0], [1], [0, 0, 1, 1], [], []>} : vector<2x2xbf16>, vector<2x30xbf16>, vector<2x30xf32> -> vector<2x30xf32>
    %c0_44 = arith.constant 0 : index
    %c0_45 = arith.constant 0 : index
    %59 = vector.load %arg13[%c0_44, %c0_45] : memref<1x30xf32, #tpu.memory_space<vmem>>, vector<1x30xf32>
    %60 = vector.broadcast %59 : vector<1x30xf32> to vector<2x30xf32>
    %61 = arith.addf %58, %60 : vector<2x30xf32>
    %cst_46 = arith.constant 0.000000e+00 : f32
    %62 = vector.broadcast %cst_46 : f32 to vector<2x30xf32>
    %63 = arith.maximumf %61, %62 : vector<2x30xf32>
    %64 = arith.truncf %63 : vector<2x30xf32> to vector<2x30xbf16>
    %c0_47 = arith.constant 0 : index
    %c0_48 = arith.constant 0 : index
    %65 = vector.load %arg14[%c0_47, %c0_48] : memref<30x1xbf16, #tpu.memory_space<vmem>>, vector<30x1xbf16>
    %cst_49 = arith.constant dense<0.000000e+00> : vector<2x1xf32>
    %66 = tpu.matmul %64, %65, %cst_49 {dimension_numbers = #tpu.dot_dimension_numbers<[1], [0], [0], [1], [0, 0, 1, 1], [], []>} : vector<2x30xbf16>, vector<30x1xbf16>, vector<2x1xf32> -> vector<2x1xf32>
    %c0_50 = arith.constant 0 : index
    %c0_51 = arith.constant 0 : index
    %67 = vector.load %arg15[%c0_50, %c0_51] : memref<1x1xf32, #tpu.memory_space<vmem>>, vector<1x1xf32>
    %68 = vector.broadcast %67 : vector<1x1xf32> to vector<2x1xf32>
    %69 = arith.addf %66, %68 : vector<2x1xf32>
    %c0_52 = arith.constant 0 : index
    %c0_53 = arith.constant 0 : index
    %70 = vector.load %arg16[%c0_52, %c0_53] : memref<2x1xf32, #tpu.memory_space<vmem>>, vector<2x1xf32>
    tpu.vector_store %arg16[%c0_52, %c0_53], %69 {strides = array<i32>} : memref<2x1xf32, #tpu.memory_space<vmem>>, vector<2x1xf32>,
    return
  }
  func.func @transform_0(%arg0: i32) -> (i32, i32, i32) {
    %c0_i32 = arith.constant 0 : i32
    %c0_i32_0 = arith.constant 0 : i32
    %c0_i32_1 = arith.constant 0 : i32
    %c0_i32_2 = arith.constant 0 : i32
    return %c0_i32, %c0_i32_0, %c0_i32_1 : i32, i32, i32
  }
  func.func @transform_1(%arg0: i32) -> (i32, i32) {
    %c0_i32 = arith.constant 0 : i32
    %c0_i32_0 = arith.constant 0 : i32
    %c0_i32_1 = arith.constant 0 : i32
    return %c0_i32, %c0_i32_0 : i32, i32
  }
  func.func @transform_2(%arg0: i32) -> (i32, i32) {
    %c0_i32 = arith.constant 0 : i32
    %c0_i32_0 = arith.constant 0 : i32
    %c0_i32_1 = arith.constant 0 : i32
    return %c0_i32, %c0_i32_0 : i32, i32
  }
  func.func @transform_3(%arg0: i32) -> (i32, i32) {
    %c0_i32 = arith.constant 0 : i32
    %c0_i32_0 = arith.constant 0 : i32
    %c0_i32_1 = arith.constant 0 : i32
    return %c0_i32, %c0_i32_0 : i32, i32
  }
  func.func @transform_4(%arg0: i32) -> (i32, i32) {
    %c0_i32 = arith.constant 0 : i32
    %c0_i32_0 = arith.constant 0 : i32
    %c0_i32_1 = arith.constant 0 : i32
    return %c0_i32, %c0_i32_0 : i32, i32
  }
  func.func @transform_5(%arg0: i32) -> (i32, i32) {
    %c0_i32 = arith.constant 0 : i32
    %c0_i32_0 = arith.constant 0 : i32
    %c0_i32_1 = arith.constant 0 : i32
    return %c0_i32, %c0_i32_0 : i32, i32
  }
  func.func @transform_6(%arg0: i32) -> (i32, i32) {
    %c0_i32 = arith.constant 0 : i32
    %c0_i32_0 = arith.constant 0 : i32
    %c0_i32_1 = arith.constant 0 : i32
    return %c0_i32, %c0_i32_0 : i32, i32
  }
  func.func @transform_7(%arg0: i32) -> (i32, i32) {
    %c0_i32 = arith.constant 0 : i32
    %c0_i32_0 = arith.constant 0 : i32
    %c0_i32_1 = arith.constant 0 : i32
    return %c0_i32, %c0_i32_0 : i32, i32
  }
  func.func @transform_8(%arg0: i32) -> (i32, i32) {
    %c0_i32 = arith.constant 0 : i32
    %c0_i32_0 = arith.constant 0 : i32
    %c0_i32_1 = arith.constant 0 : i32
    return %c0_i32, %c0_i32_0 : i32, i32
  }
  func.func @transform_9(%arg0: i32) -> (i32, i32) {
    %c0_i32 = arith.constant 0 : i32
    %c0_i32_0 = arith.constant 0 : i32
    %c0_i32_1 = arith.constant 0 : i32
    return %c0_i32, %c0_i32_0 : i32, i32
  }
  func.func @transform_10(%arg0: i32) -> (i32, i32) {
    %c0_i32 = arith.constant 0 : i32
    %c0_i32_0 = arith.constant 0 : i32
    %c0_i32_1 = arith.constant 0 : i32
    return %c0_i32, %c0_i32_0 : i32, i32
  }
  func.func @transform_11(%arg0: i32) -> (i32, i32) {
    %c0_i32 = arith.constant 0 : i32
    %c0_i32_0 = arith.constant 0 : i32
    %c0_i32_1 = arith.constant 0 : i32
    return %c0_i32, %c0_i32_0 : i32, i32
  }
  func.func @transform_12(%arg0: i32) -> (i32, i32) {
    %c0_i32 = arith.constant 0 : i32
    %c0_i32_0 = arith.constant 0 : i32
    %c0_i32_1 = arith.constant 0 : i32
    return %c0_i32, %c0_i32_0 : i32, i32
  }
  func.func @transform_13(%arg0: i32) -> (i32, i32) {
    %c0_i32 = arith.constant 0 : i32
    %c0_i32_0 = arith.constant 0 : i32
    %c0_i32_1 = arith.constant 0 : i32
    return %c0_i32, %c0_i32_0 : i32, i32
  }
  func.func @transform_14(%arg0: i32) -> (i32, i32) {
    %c0_i32 = arith.constant 0 : i32
    %c0_i32_0 = arith.constant 0 : i32
    %c0_i32_1 = arith.constant 0 : i32
    return %c0_i32, %c0_i32_0 : i32, i32
  }
  func.func @transform_15(%arg0: i32) -> (i32, i32) {
    %c0_i32 = arith.constant 0 : i32
    %c0_i32_0 = arith.constant 0 : i32
    %c0_i32_1 = arith.constant 0 : i32
    return %c0_i32, %c0_i32_0 : i32, i32
  }
}

</mosaic_0001>

<llo_original>
// kernel: cnet_forward.2
$region0: #{cnet_forward.2}
  #allocation0 [shape = 'u32[]', space=smem, size = 0x4, offset = 0x4, fixed_abs, tag = 'smem constant byte address 0x4 - core index']
  #allocation1 [shape = 'u32[144,128]{1,0:T(1,128)}', space=vmem, size = 0x12000, scoped, tag = 'internal scratch']
  %s0 = inlined_call_operand.vmem [shape: bf16[36,512], index: 0, kind: input, shape index: {}]
  %s1 = inlined_call_operand.vmem [shape: bf16[16,36], index: 1, kind: input, shape index: {}]
  %s2 = inlined_call_operand.vmem [shape: f32[16,1], index: 2, kind: input, shape index: {}]
  %s3 = inlined_call_operand.vmem [shape: bf16[16,128], index: 3, kind: output, shape index: {}]
  %s4 = sld [smem:[#allocation0]]
  $region22: #{cnet_forward.2} parent=0
    _
  %s6 = ssub.s32 1, %s4
  %s7 = scalar_select 0, %s6, %s4
  // Predicated region
  $region2: #{cnet_forward.2} parent=0 // pred_check
    _
  $region3: #{cnet_forward.2} parent=0 // pred_check_branch
    %9 = sbr.rel (0) target = $region5
  $region4: #{cnet_forward.2} parent=0 // pred_region
    _
  $region5: #{cnet_forward.2} parent=0 // pred_fallthru
    _
  // Predicated region
  $region6: #{cnet_forward.2} parent=0 // pred_check
    _
  $region7: #{cnet_forward.2} parent=0 // pred_check_branch
    %11 = sbr.rel (0) target = $region9
  $region8: #{cnet_forward.2} parent=0 // pred_region
    _
  $region9: #{cnet_forward.2} parent=0 // pred_fallthru
    _
  // Predicated region
  $region10: #{cnet_forward.2} parent=0 // pred_check
    _
  $region11: #{cnet_forward.2} parent=0 // pred_check_branch
    %13 = sbr.rel (0) target = $region13
  $region12: #{cnet_forward.2} parent=0 // pred_region
    _
  $region13: #{cnet_forward.2} parent=0 // pred_fallthru
    _
  %v15 = vld [vmem:[%s1] sm:$0xf]
  %v16 = vld [vmem:[%s1 + $0x4] sm:$0xf]
  %v17 = vld [vmem:[%s0] sm:$0xff]
  %v18 = vld [vmem:[%s0 + $0x8] sm:$0xff]
  %v19 = vld [vmem:[%s0 + $0x10] sm:$0xff]
  %v20 = vld [vmem:[%s0 + $0x18] sm:$0xff]
  %v21 = vld [vmem:[%s0 + $0x20] sm:$0xff]
  %v22 = vld [vmem:[%s0 + $0x28] sm:$0xff]
  %v23 = vld [vmem:[%s0 + $0x30] sm:$0xff]
  %v24 = vld [vmem:[%s0 + $0x38] sm:$0xff]
  %v25 = vld [vmem:[%s0 + $0x40] sm:$0x33]
  %v26 = vld [vmem:[%s0 + $0x48] sm:$0x33]
  %v29 = vunpack.c.l.b16 %v15
  %v30 = vunpack.c.l.b16 %v16
  %v31 = vpack.c.b16 %v30, %v29
  %v42 = vunpack.c.l.b16 %v17
  %v43 = vunpack.c.h.b16 %v17
  %v44 = vunpack.c.l.b16 %v18
  %v45 = vunpack.c.h.b16 %v18
  %v46 = vunpack.c.l.b16 %v19
  %v47 = vunpack.c.h.b16 %v19
  %v48 = vunpack.c.l.b16 %v20
  %v49 = vunpack.c.h.b16 %v20
  %v50 = vunpack.c.l.b16 %v21
  %v51 = vunpack.c.h.b16 %v21
  %v52 = vunpack.c.l.b16 %v22
  %v53 = vunpack.c.h.b16 %v22
  %v54 = vunpack.c.l.b16 %v23
  %v55 = vunpack.c.h.b16 %v23
  %v56 = vunpack.c.l.b16 %v24
  %v57 = vunpack.c.h.b16 %v24
  %v58 = vunpack.c.l.b16 %v25
  %v59 = vunpack.c.h.b16 %v25
  %v60 = vunpack.c.l.b16 %v26
  %v61 = vunpack.c.h.b16 %v26
  %v62 = vpack.c.b16 %v46, %v42
  %v63 = vpack.c.b16 %v47, %v43
  %v64 = vpack.c.b16 %v48, %v44
  %v65 = vpack.c.b16 %v49, %v45
  %v66 = vpack.c.b16 %v54, %v50
  %v67 = vpack.c.b16 %v55, %v51
  %v68 = vpack.c.b16 %v56, %v52
  %v69 = vpack.c.b16 %v57, %v53
  %v70 = vpack.c.b16 %v58, %v58
  %v71 = vpack.c.b16 %v59, %v59
  %v72 = vpack.c.b16 %v60, %v60
  %v73 = vpack.c.b16 %v61, %v61
  %vm82 = vcmask 293888
  %v84 = vsel %vm82, %v31, 0
  %vm86 = vcmask 1041408
  %v88 = vsel %vm86, %v70, 0
  %v91 = vsel %vm86, %v71, 0
  %v94 = vsel %vm86, %v72, 0
  %v97 = vsel %vm86, %v73, 0
  %99 = vmatprep.subr.bf16.mxu0 0
  %100 = vmatpush1.bf16.msra.mxu0 0
  %101 = vmatprep.subr.bf16.mxu0 0
  %102 = vmatpush1.bf16.msra.mxu0 0
  %103 = vmatprep.subr.bf16.mxu0 0
  %104 = vmatpush1.bf16.msra.mxu0 0
  %105 = vmatprep.subr.bf16.mxu0 0
  %106 = vmatpush1.bf16.msra.mxu0 0
  %107 = vmatprep.subr.bf16.mxu0 0
  %108 = vmatpush1.bf16.msra.mxu0 0
  %109 = vmatprep.subr.bf16.mxu0 %v91
  %110 = vmatpush1.bf16.msra.mxu0 %v88
  %111 = vmatprep.subr.bf16.mxu0 %v67
  %112 = vmatpush1.bf16.msra.mxu0 %v66
  %113 = vmatprep.subr.bf16.mxu0 %v63
  %114 = vmatpush1.bf16.msra.mxu0 %v62
  %115 = vmatprep.subr.bf16.mxu0 0
  %116 = vmatpush2.bf16.msra.mxu0 0
  %117 = vmatprep.subr.bf16.mxu0 0
  %118 = vmatpush2.bf16.msra.mxu0 0
  %119 = vmatprep.subr.bf16.mxu0 0
  %120 = vmatpush2.bf16.msra.mxu0 0
  %121 = vmatprep.subr.bf16.mxu0 0
  %122 = vmatpush2.bf16.msra.mxu0 0
  %123 = vmatprep.subr.bf16.mxu0 0
  %124 = vmatpush2.bf16.msra.mxu0 0
  %125 = vmatprep.subr.bf16.mxu0 0
  %126 = vmatpush2.bf16.msra.mxu0 0
  %127 = vmatprep.subr.bf16.mxu0 0
  %128 = vmatpush2.bf16.msra.mxu0 0
  %129 = vmatprep.subr.bf16.mxu0 0
  %130 = vmatpush2.bf16.msra.mxu0 0
  %131 = vmatprep.mubr.bf16.mxu0 0
  %132 = vmatmul.mubr.bf16.gmra.mxu0 %v84
  %v133 = vpop.f32.mrf.mxu0
  %v134 = vadd.f32 0.0, %v133
  %v135 = vpop.f32.mrf.mxu0
  %v136 = vadd.f32 0.0, %v135
  %v137 = vpop.f32.mrf.mxu0
  %v138 = vadd.f32 0.0, %v137
  %v139 = vpop.f32.mrf.mxu0
  %v140 = vadd.f32 0.0, %v139
  %141 = vdwg.mxu0
  %142 = vmatprep.subr.bf16.mxu0 0
  %143 = vmatpush1.bf16.msra.mxu0 0
  %144 = vmatprep.subr.bf16.mxu0 0
  %145 = vmatpush1.bf16.msra.mxu0 0
  %146 = vmatprep.subr.bf16.mxu0 0
  %147 = vmatpush1.bf16.msra.mxu0 0
  %148 = vmatprep.subr.bf16.mxu0 0
  %149 = vmatpush1.bf16.msra.mxu0 0
  %150 = vmatprep.subr.bf16.mxu0 0
  %151 = vmatpush1.bf16.msra.mxu0 0
  %152 = vmatprep.subr.bf16.mxu0 %v97
  %153 = vmatpush1.bf16.msra.mxu0 %v94
  %154 = vmatprep.subr.bf16.mxu0 %v69
  %155 = vmatpush1.bf16.msra.mxu0 %v68
  %156 = vmatprep.subr.bf16.mxu0 %v65
  %157 = vmatpush1.bf16.msra.mxu0 %v64
  %158 = vmatprep.subr.bf16.mxu0 0
  %159 = vmatpush2.bf16.msra.mxu0 0
  %160 = vmatprep.subr.bf16.mxu0 0
  %161 = vmatpush2.bf16.msra.mxu0 0
  %162 = vmatprep.subr.bf16.mxu0 0
  %163 = vmatpush2.bf16.msra.mxu0 0
  %164 = vmatprep.subr.bf16.mxu0 0
  %165 = vmatpush2.bf16.msra.mxu0 0
  %166 = vmatprep.subr.bf16.mxu0 0
  %167 = vmatpush2.bf16.msra.mxu0 0
  %168 = vmatprep.subr.bf16.mxu0 0
  %169 = vmatpush2.bf16.msra.mxu0 0
  %170 = vmatprep.subr.bf16.mxu0 0
  %171 = vmatpush2.bf16.msra.mxu0 0
  %172 = vmatprep.subr.bf16.mxu0 0
  %173 = vmatpush2.bf16.msra.mxu0 0
  %174 = vmatprep.mubr.bf16.mxu0 0
  %175 = vmatmul.mubr.bf16.gmra.mxu0 %v84
  %v176 = vpop.f32.mrf.mxu0
  %v177 = vadd.f32 0.0, %v176
  %v178 = vpop.f32.mrf.mxu0
  %v179 = vadd.f32 0.0, %v178
  %v180 = vpop.f32.mrf.mxu0
  %v181 = vadd.f32 0.0, %v180
  %v182 = vpop.f32.mrf.mxu0
  %v183 = vadd.f32 0.0, %v182
  %184 = vdwg.mxu0
  %v185 = vmax.f32 %v134, %v136
  %v186 = vmax.f32 %v138, %v140
  %v187 = vmax.f32 %v185, %v177
  %v188 = vmax.f32 %v186, %v181
  %v189 = vmax.f32 %v187, %v179
  %v190 = vmax.f32 %v188, %v183
  %v191 = vld [vmem:[%s2] sm:$0xff]
  %v192 = vld [vmem:[%s2 + $0x8] sm:$0xff]
  %194 = vset.pattern.permute.xlu0 0
  %195 = vperm.xlu0 %194, %v191
  %v196 = vpop.permute.xlu0 %195
  %199 = vset.pattern.permute.xlu0 0
  %200 = vperm.xlu0 %199, %v192
  %v201 = vpop.permute.xlu0 %200
  %v203 = vadd.f32 %v189, %v196
  %v204 = vadd.f32 %v190, %v201
  %vm205 = vcmp.gt.f32.partialorder %v203, 0.0
  %vm206 = vcmp.gt.f32.partialorder %v204, 0.0
  %v207 = vmul.f32 %v203, 0.01
  %v208 = vmul.f32 %v204, 0.01
  %v209 = vsel %vm205, %v203, %v207
  %v210 = vsel %vm206, %v204, %v208
  %v211 = vpack.c.bf16 %v210, %v209
  %v213 = vunpack.c.l.b16 %v211
  %v214 = vunpack.c.h.b16 %v211
  %v215 = vpack.c.b16 %v213, %v213
  %v216 = vpack.c.b16 %v214, %v214
  %219 = vst [vmem:[%s3] sm:$0xf] %v215
  %220 = vst [vmem:[%s3 + $0x4] sm:$0xf] %v216
  // Predicated region
  $region14: #{cnet_forward.2} parent=0 // pred_check
    _
  $region15: #{cnet_forward.2} parent=0 // pred_check_branch
    %222 = sbr.rel (0) target = $region17
  $region16: #{cnet_forward.2} parent=0 // pred_region
    _
  $region17: #{cnet_forward.2} parent=0 // pred_fallthru
    _
  // Predicated region
  $region18: #{cnet_forward.2} parent=0 // pred_check
    _
  $region19: #{cnet_forward.2} parent=0 // pred_check_branch
    %224 = sbr.rel (0) target = $region21
  $region20: #{cnet_forward.2} parent=0 // pred_region
    _
  $region21: #{cnet_forward.2} parent=0 // pred_fallthru
    _

// kernel: cnet_forward.3
$region0: #{cnet_forward.3}
  #allocation0 [shape = 'u32[]', space=smem, size = 0x4, offset = 0x4, fixed_abs, tag = 'smem constant byte address 0x4 - core index']
  #allocation1 [shape = 'u32[144,128]{1,0:T(1,128)}', space=vmem, size = 0x12000, scoped, tag = 'internal scratch']
  #allocation2 [shape = 'f32[1,1]{1,0:T(1,128)S(1)}', space=vmem, size = 0x200, scoped, tag = 'scoped memory for cnet_forward.3']
  %s0 = inlined_call_operand.vmem [shape: bf16[4,2,576], index: 0, kind: input, shape index: {}]
  %s1 = inlined_call_operand.vmem [shape: bf16[2,4], index: 1, kind: input, shape index: {}]
  %s2 = inlined_call_operand.vmem [shape: bf16[576,128], index: 2, kind: input, shape index: {}]
  %s3 = inlined_call_operand.vmem [shape: f32[1,128], index: 3, kind: input, shape index: {}]
  %s4 = inlined_call_operand.vmem [shape: bf16[128,512], index: 4, kind: input, shape index: {}]
  %s5 = inlined_call_operand.vmem [shape: bf16[4,512], index: 5, kind: input, shape index: {}]
  %s6 = inlined_call_operand.vmem [shape: f32[1,512], index: 6, kind: input, shape index: {}]
  %s7 = inlined_call_operand.vmem [shape: bf16[512,128], index: 7, kind: input, shape index: {}]
  %s8 = inlined_call_operand.vmem [shape: f32[1,128], index: 8, kind: input, shape index: {}]
  %s9 = inlined_call_operand.vmem [shape: bf16[128,2], index: 9, kind: input, shape index: {}]
  %s10 = inlined_call_operand.vmem [shape: f32[1,2], index: 10, kind: input, shape index: {}]
  %s11 = inlined_call_operand.vmem [shape: bf16[2,30], index: 11, kind: input, shape index: {}]
  %s12 = inlined_call_operand.vmem [shape: f32[1,30], index: 12, kind: input, shape index: {}]
  %s13 = inlined_call_operand.vmem [shape: bf16[30,1], index: 13, kind: input, shape index: {}]
  %s14 = inlined_call_operand.<no memory space> [shape: f32[1,1], index: 14, kind: input, shape index: {}]
  %s15 = inlined_call_operand.vmem [shape: f32[2,1], index: 15, kind: output, shape index: {}]
  %s16 = sld [smem:[#allocation0]]
  $region70: #{cnet_forward.3} parent=0
    _
  %s18 = ssub.s32 1, %s16
  %s19 = scalar_select 0, %s18, %s16
  %v20 = vstv %s14
  %21 = vst [vmem:[#allocation2] sm:$0x1] %v20
  // Predicated region
  $region2: #{cnet_forward.3} parent=0 // pred_check
    _
  $region3: #{cnet_forward.3} parent=0 // pred_check_branch
    %23 = sbr.rel (0) target = $region5
  $region4: #{cnet_forward.3} parent=0 // pred_region
    _
  $region5: #{cnet_forward.3} parent=0 // pred_fallthru
    _
  // Predicated region
  $region6: #{cnet_forward.3} parent=0 // pred_check
    _
  $region7: #{cnet_forward.3} parent=0 // pred_check_branch
    %25 = sbr.rel (0) target = $region9
  $region8: #{cnet_forward.3} parent=0 // pred_region
    _
  $region9: #{cnet_forward.3} parent=0 // pred_fallthru
    _
  // Predicated region
  $region10: #{cnet_forward.3} parent=0 // pred_check
    _
  $region11: #{cnet_forward.3} parent=0 // pred_check_branch
    %27 = sbr.rel (0) target = $region13
  $region12: #{cnet_forward.3} parent=0 // pred_region
    _
  $region13: #{cnet_forward.3} parent=0 // pred_fallthru
    _
  // Predicated region
  $region14: #{cnet_forward.3} parent=0 // pred_check
    _
  $region15: #{cnet_forward.3} parent=0 // pred_check_branch
    %29 = sbr.rel (0) target = $region17
  $region16: #{cnet_forward.3} parent=0 // pred_region
    _
  $region17: #{cnet_forward.3} parent=0 // pred_fallthru
    _
  // Predicated region
  $region18: #{cnet_forward.3} parent=0 // pred_check
    _
  $region19: #{cnet_forward.3} parent=0 // pred_check_branch
    %31 = sbr.rel (0) target = $region21
  $region20: #{cnet_forward.3} parent=0 // pred_region
    _
  $region21: #{cnet_forward.3} parent=0 // pred_fallthru
    _
  // Predicated region
  $region22: #{cnet_forward.3} parent=0 // pred_check
    _
  $region23: #{cnet_forward.3} parent=0 // pred_check_branch
    %33 = sbr.rel (0) target = $region25
  $region24: #{cnet_forward.3} parent=0 // pred_region
    _
  $region25: #{cnet_forward.3} parent=0 // pred_fallthru
    _
  // Predicated region
  $region26: #{cnet_forward.3} parent=0 // pred_check
    _
  $region27: #{cnet_forward.3} parent=0 // pred_check_branch
    %35 = sbr.rel (0) target = $region29
  $region28: #{cnet_forward.3} parent=0 // pred_region
    _
  $region29: #{cnet_forward.3} parent=0 // pred_fallthru
    _
  // Predicated region
  $region30: #{cnet_forward.3} parent=0 // pred_check
    _
  $region31: #{cnet_forward.3} parent=0 // pred_check_branch
    %37 = sbr.rel (0) target = $region33
  $region32: #{cnet_forward.3} parent=0 // pred_region
    _
  $region33: #{cnet_forward.3} parent=0 // pred_fallthru
    _
  // Predicated region
  $region34: #{cnet_forward.3} parent=0 // pred_check
    _
  $region35: #{cnet_forward.3} parent=0 // pred_check_branch
    %39 = sbr.rel (0) target = $region37
  $region36: #{cnet_forward.3} parent=0 // pred_region
    _
  $region37: #{cnet_forward.3} parent=0 // pred_fallthru
    _
  // Predicated region
  $region38: #{cnet_forward.3} parent=0 // pred_check
    _
  $region39: #{cnet_forward.3} parent=0 // pred_check_branch
    %41 = sbr.rel (0) target = $region41
  $region40: #{cnet_forward.3} parent=0 // pred_region
    _
  $region41: #{cnet_forward.3} parent=0 // pred_fallthru
    _
  // Predicated region
  $region42: #{cnet_forward.3} parent=0 // pred_check
    _
  $region43: #{cnet_forward.3} parent=0 // pred_check_branch
    %43 = sbr.rel (0) target = $region45
  $region44: #{cnet_forward.3} parent=0 // pred_region
    _
  $region45: #{cnet_forward.3} parent=0 // pred_fallthru
    _
  // Predicated region
  $region46: #{cnet_forward.3} parent=0 // pred_check
    _
  $region47: #{cnet_forward.3} parent=0 // pred_check_branch
    %45 = sbr.rel (0) target = $region49
  $region48: #{cnet_forward.3} parent=0 // pred_region
    _
  $region49: #{cnet_forward.3} parent=0 // pred_fallthru
    _
  // Predicated region
  $region50: #{cnet_forward.3} parent=0 // pred_check
    _
  $region51: #{cnet_forward.3} parent=0 // pred_check_branch
    %47 = sbr.rel (0) target = $region53
  $region52: #{cnet_forward.3} parent=0 // pred_region
    _
  $region53: #{cnet_forward.3} parent=0 // pred_fallthru
    _
  // Predicated region
  $region54: #{cnet_forward.3} parent=0 // pred_check
    _
  $region55: #{cnet_forward.3} parent=0 // pred_check_branch
    %49 = sbr.rel (0) target = $region57
  $region56: #{cnet_forward.3} parent=0 // pred_region
    _
  $region57: #{cnet_forward.3} parent=0 // pred_fallthru
    _
  // Predicated region
  $region58: #{cnet_forward.3} parent=0 // pred_check
    _
  $region59: #{cnet_forward.3} parent=0 // pred_check_branch
    %51 = sbr.rel (0) target = $region61
  $region60: #{cnet_forward.3} parent=0 // pred_region
    _
  $region61: #{cnet_forward.3} parent=0 // pred_fallthru
    _
  %v53 = vld [vmem:[%s2] sm:$0xf]
  %v54 = vld [vmem:[%s2 + $0x4] sm:$0xf]
  %v55 = vld [vmem:[%s2 + $0x8] sm:$0xf]
  %v56 = vld [vmem:[%s2 + $0xc] sm:$0xf]
  %v57 = vld [vmem:[%s2 + $0x10] sm:$0xf]
  %v58 = vld [vmem:[%s2 + $0x14] sm:$0xf]
  %v59 = vld [vmem:[%s2 + $0x18] sm:$0xf]
  %v60 = vld [vmem:[%s2 + $0x1c] sm:$0xf]
  %v61 = vld [vmem:[%s2 + $0x20] sm:$0xf]
  %v62 = vld [vmem:[%s2 + $0x24] sm:$0xf]
  %v63 = vld [vmem:[%s2 + $0x28] sm:$0xf]
  %v64 = vld [vmem:[%s2 + $0x2c] sm:$0xf]
  %v65 = vld [vmem:[%s2 + $0x30] sm:$0xf]
  %v66 = vld [vmem:[%s2 + $0x34] sm:$0xf]
  %v67 = vld [vmem:[%s2 + $0x38] sm:$0xf]
  %v68 = vld [vmem:[%s2 + $0x3c] sm:$0xf]
  %v69 = vld [vmem:[%s2 + $0x40] sm:$0xf]
  %v70 = vld [vmem:[%s2 + $0x44] sm:$0xf]
  %v71 = vld [vmem:[%s2 + $0x48] sm:$0xf]
  %v72 = vld [vmem:[%s2 + $0x4c] sm:$0xf]
  %v73 = vld [vmem:[%s2 + $0x50] sm:$0xf]
  %v74 = vld [vmem:[%s2 + $0x54] sm:$0xf]
  %v75 = vld [vmem:[%s2 + $0x58] sm:$0xf]
  %v76 = vld [vmem:[%s2 + $0x5c] sm:$0xf]
  %v77 = vld [vmem:[%s2 + $0x60] sm:$0xf]
  %v78 = vld [vmem:[%s2 + $0x64] sm:$0xf]
  %v79 = vld [vmem:[%s2 + $0x68] sm:$0xf]
  %v80 = vld [vmem:[%s2 + $0x6c] sm:$0xf]
  %v81 = vld [vmem:[%s2 + $0x70] sm:$0xf]
  %v82 = vld [vmem:[%s2 + $0x74] sm:$0xf]
  %v83 = vld [vmem:[%s2 + $0x78] sm:$0xf]
  %v84 = vld [vmem:[%s2 + $0x7c] sm:$0xf]
  %v85 = vld [vmem:[%s2 + $0x80] sm:$0xf]
  %v86 = vld [vmem:[%s2 + $0x84] sm:$0xf]
  %v87 = vld [vmem:[%s2 + $0x88] sm:$0xf]
  %v88 = vld [vmem:[%s2 + $0x8c] sm:$0xf]
  %v89 = vld [vmem:[%s2 + $0x90] sm:$0xf]
  %v90 = vld [vmem:[%s2 + $0x94] sm:$0xf]
  %v91 = vld [vmem:[%s2 + $0x98] sm:$0xf]
  %v92 = vld [vmem:[%s2 + $0x9c] sm:$0xf]
  %v93 = vld [vmem:[%s2 + $0xa0] sm:$0xf]
  %v94 = vld [vmem:[%s2 + $0xa4] sm:$0xf]
  %v95 = vld [vmem:[%s2 + $0xa8] sm:$0xf]
  %v96 = vld [vmem:[%s2 + $0xac] sm:$0xf]
  %v97 = vld [vmem:[%s2 + $0xb0] sm:$0xf]
  %v98 = vld [vmem:[%s2 + $0xb4] sm:$0xf]
  %v99 = vld [vmem:[%s2 + $0xb8] sm:$0xf]
  %v100 = vld [vmem:[%s2 + $0xbc] sm:$0xf]
  %v101 = vld [vmem:[%s2 + $0xc0] sm:$0xf]
  %v102 = vld [vmem:[%s2 + $0xc4] sm:$0xf]
  %v103 = vld [vmem:[%s2 + $0xc8] sm:$0xf]
  %v104 = vld [vmem:[%s2 + $0xcc] sm:$0xf]
  %v105 = vld [vmem:[%s2 + $0xd0] sm:$0xf]
  %v106 = vld [vmem:[%s2 + $0xd4] sm:$0xf]
  %v107 = vld [vmem:[%s2 + $0xd8] sm:$0xf]
  %v108 = vld [vmem:[%s2 + $0xdc] sm:$0xf]
  %v109 = vld [vmem:[%s2 + $0xe0] sm:$0xf]
  %v110 = vld [vmem:[%s2 + $0xe4] sm:$0xf]
  %v111 = vld [vmem:[%s2 + $0xe8] sm:$0xf]
  %v112 = vld [vmem:[%s2 + $0xec] sm:$0xf]
  %v113 = vld [vmem:[%s2 + $0xf0] sm:$0xf]
  %v114 = vld [vmem:[%s2 + $0xf4] sm:$0xf]
  %v115 = vld [vmem:[%s2 + $0xf8] sm:$0xf]
  %v116 = vld [vmem:[%s2 + $0xfc] sm:$0xf]
  %v117 = vld [vmem:[%s2 + $0x100] sm:$0xf]
  %v118 = vld [vmem:[%s2 + $0x104] sm:$0xf]
  %v119 = vld [vmem:[%s2 + $0x108] sm:$0xf]
  %v120 = vld [vmem:[%s2 + $0x10c] sm:$0xf]
  %v121 = vld [vmem:[%s2 + $0x110] sm:$0xf]
  %v122 = vld [vmem:[%s2 + $0x114] sm:$0xf]
  %v123 = vld [vmem:[%s2 + $0x118] sm:$0xf]
  %v124 = vld [vmem:[%s2 + $0x11c] sm:$0xf]
  %v125 = vld [vmem:[%s0] sm:$0x1f]
  %v127 = vcombine.high %v125, %v125
  %v129 = vunpack.c.l.s4 1966171168
  %v130 = vunpack.c.0.s8 %v129
  %v131 = vlaneseq
  %v132 = vshrl.u32 %v131, 7
  %v133 = vsub.s32 %v130, %v132
  %v134 = vrot.slane %v125, %v133
  %v136 = vunpack.c.l.s4 1966171168
  %v137 = vunpack.c.0.s8 %v136
  %v138 = vlaneseq
  %v139 = vshrl.u32 %v138, 7
  %v140 = vsub.s32 %v137, %v139
  %v141 = vrot.slane %v127, %v140
  %v142 = vcombine.high %v134, %v134
  %v144 = vunpack.c.l.s4 1966171168
  %v145 = vunpack.c.0.s8 %v144
  %v146 = vlaneseq
  %v147 = vshrl.u32 %v146, 7
  %v148 = vsub.s32 %v145, %v147
  %v149 = vrot.slane %v134, %v148
  %v151 = vunpack.c.l.s4 1966171168
  %v152 = vunpack.c.0.s8 %v151
  %v153 = vlaneseq
  %v154 = vshrl.u32 %v153, 7
  %v155 = vsub.s32 %v152, %v154
  %v156 = vrot.slane %v141, %v155
  %v158 = vunpack.c.l.s4 1966171168
  %v159 = vunpack.c.0.s8 %v158
  %v160 = vlaneseq
  %v161 = vshrl.u32 %v160, 7
  %v162 = vsub.s32 %v159, %v161
  %v163 = vrot.slane %v142, %v162
  %v164 = vcombine.high %v149, %v149
  %v165 = vcombine.high %v163, %v163
  %v242 = vunpack.c.l.b16 %v53
  %v243 = vunpack.c.l.b16 %v54
  %v244 = vunpack.c.l.b16 %v55
  %v245 = vunpack.c.l.b16 %v56
  %v246 = vunpack.c.l.b16 %v57
  %v247 = vunpack.c.l.b16 %v58
  %v248 = vunpack.c.l.b16 %v59
  %v249 = vunpack.c.l.b16 %v60
  %v250 = vunpack.c.l.b16 %v61
  %v251 = vunpack.c.l.b16 %v62
  %v252 = vunpack.c.l.b16 %v63
  %v253 = vunpack.c.l.b16 %v64
  %v254 = vunpack.c.l.b16 %v65
  %v255 = vunpack.c.l.b16 %v66
  %v256 = vunpack.c.l.b16 %v67
  %v257 = vunpack.c.l.b16 %v68
  %v258 = vunpack.c.l.b16 %v69
  %v259 = vunpack.c.l.b16 %v70
  %v260 = vunpack.c.l.b16 %v71
  %v261 = vunpack.c.l.b16 %v72
  %v262 = vunpack.c.l.b16 %v73
  %v263 = vunpack.c.l.b16 %v74
  %v264 = vunpack.c.l.b16 %v75
  %v265 = vunpack.c.l.b16 %v76
  %v266 = vunpack.c.l.b16 %v77
  %v267 = vunpack.c.l.b16 %v78
  %v268 = vunpack.c.l.b16 %v79
  %v269 = vunpack.c.l.b16 %v80
  %v270 = vunpack.c.l.b16 %v81
  %v271 = vunpack.c.l.b16 %v82
  %v272 = vunpack.c.l.b16 %v83
  %v273 = vunpack.c.l.b16 %v84
  %v274 = vunpack.c.l.b16 %v85
  %v275 = vunpack.c.l.b16 %v86
  %v276 = vunpack.c.l.b16 %v87
  %v277 = vunpack.c.l.b16 %v88
  %v278 = vunpack.c.l.b16 %v89
  %v279 = vunpack.c.l.b16 %v90
  %v280 = vunpack.c.l.b16 %v91
  %v281 = vunpack.c.l.b16 %v92
  %v282 = vunpack.c.l.b16 %v93
  %v283 = vunpack.c.l.b16 %v94
  %v284 = vunpack.c.l.b16 %v95
  %v285 = vunpack.c.l.b16 %v96
  %v286 = vunpack.c.l.b16 %v97
  %v287 = vunpack.c.l.b16 %v98
  %v288 = vunpack.c.l.b16 %v99
  %v289 = vunpack.c.l.b16 %v100
  %v290 = vunpack.c.l.b16 %v101
  %v291 = vunpack.c.l.b16 %v102
  %v292 = vunpack.c.l.b16 %v103
  %v293 = vunpack.c.l.b16 %v104
  %v294 = vunpack.c.l.b16 %v105
  %v295 = vunpack.c.l.b16 %v106
  %v296 = vunpack.c.l.b16 %v107
  %v297 = vunpack.c.l.b16 %v108
  %v298 = vunpack.c.l.b16 %v109
  %v299 = vunpack.c.l.b16 %v110
  %v300 = vunpack.c.l.b16 %v111
  %v301 = vunpack.c.l.b16 %v112
  %v302 = vunpack.c.l.b16 %v113
  %v303 = vunpack.c.l.b16 %v114
  %v304 = vunpack.c.l.b16 %v115
  %v305 = vunpack.c.l.b16 %v116
  %v306 = vunpack.c.l.b16 %v117
  %v307 = vunpack.c.l.b16 %v118
  %v308 = vunpack.c.l.b16 %v119
  %v309 = vunpack.c.l.b16 %v120
  %v310 = vunpack.c.l.b16 %v121
  %v311 = vunpack.c.l.b16 %v122
  %v312 = vunpack.c.l.b16 %v123
  %v313 = vunpack.c.l.b16 %v124
  %v314 = vpack.c.b16 %v243, %v242
  %v315 = vpack.c.b16 %v245, %v244
  %v316 = vpack.c.b16 %v247, %v246
  %v317 = vpack.c.b16 %v249, %v248
  %v318 = vpack.c.b16 %v251, %v250
  %v319 = vpack.c.b16 %v253, %v252
  %v320 = vpack.c.b16 %v255, %v254
  %v321 = vpack.c.b16 %v257, %v256
  %v322 = vpack.c.b16 %v259, %v258
  %v323 = vpack.c.b16 %v261, %v260
  %v324 = vpack.c.b16 %v263, %v262
  %v325 = vpack.c.b16 %v265, %v264
  %v326 = vpack.c.b16 %v267, %v266
  %v327 = vpack.c.b16 %v269, %v268
  %v328 = vpack.c.b16 %v271, %v270
  %v329 = vpack.c.b16 %v273, %v272
  %v330 = vpack.c.b16 %v275, %v274
  %v331 = vpack.c.b16 %v277, %v276
  %v332 = vpack.c.b16 %v279, %v278
  %v333 = vpack.c.b16 %v281, %v280
  %v334 = vpack.c.b16 %v283, %v282
  %v335 = vpack.c.b16 %v285, %v284
  %v336 = vpack.c.b16 %v287, %v286
  %v337 = vpack.c.b16 %v289, %v288
  %v338 = vpack.c.b16 %v291, %v290
  %v339 = vpack.c.b16 %v293, %v292
  %v340 = vpack.c.b16 %v295, %v294
  %v341 = vpack.c.b16 %v297, %v296
  %v342 = vpack.c.b16 %v299, %v298
  %v343 = vpack.c.b16 %v301, %v300
  %v344 = vpack.c.b16 %v303, %v302
  %v345 = vpack.c.b16 %v305, %v304
  %v346 = vpack.c.b16 %v307, %v306
  %v347 = vpack.c.b16 %v309, %v308
  %v348 = vpack.c.b16 %v311, %v310
  %v349 = vpack.c.b16 %v313, %v312
  %vm386 = vcmask 523264
  %v388 = vsel %vm386, %v156, 0
  %390 = vmatprep.subr.bf16.mxu0 0
  %391 = vmatpush1.bf16.msra.mxu0 %v321
  %392 = vmatprep.subr.bf16.mxu0 0
  %393 = vmatpush1.bf16.msra.mxu0 %v320
  %394 = vmatprep.subr.bf16.mxu0 0
  %395 = vmatpush1.bf16.msra.mxu0 %v319
  %396 = vmatprep.subr.bf16.mxu0 0
  %397 = vmatpush1.bf16.msra.mxu0 %v318
  %398 = vmatprep.subr.bf16.mxu0 0
  %399 = vmatpush1.bf16.msra.mxu0 %v317
  %400 = vmatprep.subr.bf16.mxu0 0
  %401 = vmatpush1.bf16.msra.mxu0 %v316
  %402 = vmatprep.subr.bf16.mxu0 0
  %403 = vmatpush1.bf16.msra.mxu0 %v315
  %404 = vmatprep.subr.bf16.mxu0 0
  %405 = vmatpush1.bf16.msra.mxu0 %v314
  %406 = vmatprep.subr.bf16.mxu0 0
  %407 = vmatpush2.bf16.msra.mxu0 %v329
  %408 = vmatprep.subr.bf16.mxu0 0
  %409 = vmatpush2.bf16.msra.mxu0 %v328
  %410 = vmatprep.subr.bf16.mxu0 0
  %411 = vmatpush2.bf16.msra.mxu0 %v327
  %412 = vmatprep.subr.bf16.mxu0 0
  %413 = vmatpush2.bf16.msra.mxu0 %v326
  %414 = vmatprep.subr.bf16.mxu0 0
  %415 = vmatpush2.bf16.msra.mxu0 %v325
  %416 = vmatprep.subr.bf16.mxu0 0
  %417 = vmatpush2.bf16.msra.mxu0 %v324
  %418 = vmatprep.subr.bf16.mxu0 0
  %419 = vmatpush2.bf16.msra.mxu0 %v323
  %420 = vmatprep.subr.bf16.mxu0 0
  %421 = vmatpush2.bf16.msra.mxu0 %v322
  %422 = vmatprep.mubr.bf16.mxu0 %v163
  %423 = vmatmul.mubr.bf16.gmra.mxu0 %v149
  %v424 = vpop.f32.mrf.mxu0
  %v425 = vadd.f32 0.0, %v424
  %v426 = vpop.f32.mrf.mxu0
  %v427 = vpop.f32.mrf.mxu0
  %v428 = vpop.f32.mrf.mxu0
  %429 = vdwg.mxu0
  %430 = vmatprep.subr.bf16.mxu0 0
  %431 = vmatpush1.bf16.msra.mxu0 %v337
  %432 = vmatprep.subr.bf16.mxu0 0
  %433 = vmatpush1.bf16.msra.mxu0 %v336
  %434 = vmatprep.subr.bf16.mxu0 0
  %435 = vmatpush1.bf16.msra.mxu0 %v335
  %436 = vmatprep.subr.bf16.mxu0 0
  %437 = vmatpush1.bf16.msra.mxu0 %v334
  %438 = vmatprep.subr.bf16.mxu0 0
  %439 = vmatpush1.bf16.msra.mxu0 %v333
  %440 = vmatprep.subr.bf16.mxu0 0
  %441 = vmatpush1.bf16.msra.mxu0 %v332
  %442 = vmatprep.subr.bf16.mxu0 0
  %443 = vmatpush1.bf16.msra.mxu0 %v331
  %444 = vmatprep.subr.bf16.mxu0 0
  %445 = vmatpush1.bf16.msra.mxu0 %v330
  %446 = vmatprep.subr.bf16.mxu0 0
  %447 = vmatpush2.bf16.msra.mxu0 %v345
  %448 = vmatprep.subr.bf16.mxu0 0
  %449 = vmatpush2.bf16.msra.mxu0 %v344
  %450 = vmatprep.subr.bf16.mxu0 0
  %451 = vmatpush2.bf16.msra.mxu0 %v343
  %452 = vmatprep.subr.bf16.mxu0 0
  %453 = vmatpush2.bf16.msra.mxu0 %v342
  %454 = vmatprep.subr.bf16.mxu0 0
  %455 = vmatpush2.bf16.msra.mxu0 %v341
  %456 = vmatprep.subr.bf16.mxu0 0
  %457 = vmatpush2.bf16.msra.mxu0 %v340
  %458 = vmatprep.subr.bf16.mxu0 0
  %459 = vmatpush2.bf16.msra.mxu0 %v339
  %460 = vmatprep.subr.bf16.mxu0 0
  %461 = vmatpush2.bf16.msra.mxu0 %v338
  %462 = vmatprep.mubr.bf16.mxu0 %v165
  %463 = vmatmul.mubr.bf16.gmra.mxu0 %v164
  %v464 = vpop.f32.mrf.mxu0
  %v465 = vadd.f32 %v425, %v464
  %v466 = vpop.f32.mrf.mxu0
  %v467 = vpop.f32.mrf.mxu0
  %v468 = vpop.f32.mrf.mxu0
  %469 = vdwg.mxu0
  %470 = vmatprep.subr.bf16.mxu0 0
  %471 = vmatpush1.bf16.msra.mxu0 0
  %472 = vmatprep.subr.bf16.mxu0 0
  %473 = vmatpush1.bf16.msra.mxu0 0
  %474 = vmatprep.subr.bf16.mxu0 0
  %475 = vmatpush1.bf16.msra.mxu0 0
  %476 = vmatprep.subr.bf16.mxu0 0
  %477 = vmatpush1.bf16.msra.mxu0 0
  %478 = vmatprep.subr.bf16.mxu0 0
  %479 = vmatpush1.bf16.msra.mxu0 %v349
  %480 = vmatprep.subr.bf16.mxu0 0
  %481 = vmatpush1.bf16.msra.mxu0 %v348
  %482 = vmatprep.subr.bf16.mxu0 0
  %483 = vmatpush1.bf16.msra.mxu0 %v347
  %484 = vmatprep.subr.bf16.mxu0 0
  %485 = vmatpush1.bf16.msra.mxu0 %v346
  %486 = vmatprep.subr.bf16.mxu0 0
  %487 = vmatpush2.bf16.msra.mxu0 0
  %488 = vmatprep.subr.bf16.mxu0 0
  %489 = vmatpush2.bf16.msra.mxu0 0
  %490 = vmatprep.subr.bf16.mxu0 0
  %491 = vmatpush2.bf16.msra.mxu0 0
  %492 = vmatprep.subr.bf16.mxu0 0
  %493 = vmatpush2.bf16.msra.mxu0 0
  %494 = vmatprep.subr.bf16.mxu0 0
  %495 = vmatpush2.bf16.msra.mxu0 0
  %496 = vmatprep.subr.bf16.mxu0 0
  %497 = vmatpush2.bf16.msra.mxu0 0
  %498 = vmatprep.subr.bf16.mxu0 0
  %499 = vmatpush2.bf16.msra.mxu0 0
  %500 = vmatprep.subr.bf16.mxu0 0
  %501 = vmatpush2.bf16.msra.mxu0 0
  %502 = vmatprep.mubr.bf16.mxu0 0
  %503 = vmatmul.mubr.bf16.gmra.mxu0 %v388
  %v504 = vpop.f32.mrf.mxu0
  %v505 = vadd.f32 %v465, %v504
  %v506 = vpop.f32.mrf.mxu0
  %v507 = vpop.f32.mrf.mxu0
  %v508 = vpop.f32.mrf.mxu0
  %509 = vdwg.mxu0
  %s510 = scalar_lea.vmem %s0, 5
  %v511 = vld [vmem:[%s510] sm:$0x1f]
  %v513 = vcombine.high %v511, %v511
  %v515 = vunpack.c.l.s4 1966171168
  %v516 = vunpack.c.0.s8 %v515
  %v517 = vlaneseq
  %v518 = vshrl.u32 %v517, 7
  %v519 = vsub.s32 %v516, %v518
  %v520 = vrot.slane %v511, %v519
  %v522 = vunpack.c.l.s4 1966171168
  %v523 = vunpack.c.0.s8 %v522
  %v524 = vlaneseq
  %v525 = vshrl.u32 %v524, 7
  %v526 = vsub.s32 %v523, %v525
  %v527 = vrot.slane %v513, %v526
  %v528 = vcombine.high %v520, %v520
  %v530 = vunpack.c.l.s4 1966171168
  %v531 = vunpack.c.0.s8 %v530
  %v532 = vlaneseq
  %v533 = vshrl.u32 %v532, 7
  %v534 = vsub.s32 %v531, %v533
  %v535 = vrot.slane %v520, %v534
  %v537 = vunpack.c.l.s4 1966171168
  %v538 = vunpack.c.0.s8 %v537
  %v539 = vlaneseq
  %v540 = vshrl.u32 %v539, 7
  %v541 = vsub.s32 %v538, %v540
  %v542 = vrot.slane %v527, %v541
  %v544 = vunpack.c.l.s4 1966171168
  %v545 = vunpack.c.0.s8 %v544
  %v546 = vlaneseq
  %v547 = vshrl.u32 %v546, 7
  %v548 = vsub.s32 %v545, %v547
  %v549 = vrot.slane %v528, %v548
  %v550 = vcombine.high %v535, %v535
  %v551 = vcombine.high %v549, %v549
  %v557 = vsel %vm386, %v542, 0
  %559 = vmatprep.subr.bf16.mxu0 0
  %560 = vmatpush1.bf16.msra.mxu0 %v321
  %561 = vmatprep.subr.bf16.mxu0 0
  %562 = vmatpush1.bf16.msra.mxu0 %v320
  %563 = vmatprep.subr.bf16.mxu0 0
  %564 = vmatpush1.bf16.msra.mxu0 %v319
  %565 = vmatprep.subr.bf16.mxu0 0
  %566 = vmatpush1.bf16.msra.mxu0 %v318
  %567 = vmatprep.subr.bf16.mxu0 0
  %568 = vmatpush1.bf16.msra.mxu0 %v317
  %569 = vmatprep.subr.bf16.mxu0 0
  %570 = vmatpush1.bf16.msra.mxu0 %v316
  %571 = vmatprep.subr.bf16.mxu0 0
  %572 = vmatpush1.bf16.msra.mxu0 %v315
  %573 = vmatprep.subr.bf16.mxu0 0
  %574 = vmatpush1.bf16.msra.mxu0 %v314
  %575 = vmatprep.subr.bf16.mxu0 0
  %576 = vmatpush2.bf16.msra.mxu0 %v329
  %577 = vmatprep.subr.bf16.mxu0 0
  %578 = vmatpush2.bf16.msra.mxu0 %v328
  %579 = vmatprep.subr.bf16.mxu0 0
  %580 = vmatpush2.bf16.msra.mxu0 %v327
  %581 = vmatprep.subr.bf16.mxu0 0
  %582 = vmatpush2.bf16.msra.mxu0 %v326
  %583 = vmatprep.subr.bf16.mxu0 0
  %584 = vmatpush2.bf16.msra.mxu0 %v325
  %585 = vmatprep.subr.bf16.mxu0 0
  %586 = vmatpush2.bf16.msra.mxu0 %v324
  %587 = vmatprep.subr.bf16.mxu0 0
  %588 = vmatpush2.bf16.msra.mxu0 %v323
  %589 = vmatprep.subr.bf16.mxu0 0
  %590 = vmatpush2.bf16.msra.mxu0 %v322
  %591 = vmatprep.mubr.bf16.mxu0 %v549
  %592 = vmatmul.mubr.bf16.gmra.mxu0 %v535
  %v593 = vpop.f32.mrf.mxu0
  %v594 = vadd.f32 0.0, %v593
  %v595 = vpop.f32.mrf.mxu0
  %v596 = vpop.f32.mrf.mxu0
  %v597 = vpop.f32.mrf.mxu0
  %598 = vdwg.mxu0
  %599 = vmatprep.subr.bf16.mxu0 0
  %600 = vmatpush1.bf16.msra.mxu0 %v337
  %601 = vmatprep.subr.bf16.mxu0 0
  %602 = vmatpush1.bf16.msra.mxu0 %v336
  %603 = vmatprep.subr.bf16.mxu0 0
  %604 = vmatpush1.bf16.msra.mxu0 %v335
  %605 = vmatprep.subr.bf16.mxu0 0
  %606 = vmatpush1.bf16.msra.mxu0 %v334
  %607 = vmatprep.subr.bf16.mxu0 0
  %608 = vmatpush1.bf16.msra.mxu0 %v333
  %609 = vmatprep.subr.bf16.mxu0 0
  %610 = vmatpush1.bf16.msra.mxu0 %v332
  %611 = vmatprep.subr.bf16.mxu0 0
  %612 = vmatpush1.bf16.msra.mxu0 %v331
  %613 = vmatprep.subr.bf16.mxu0 0
  %614 = vmatpush1.bf16.msra.mxu0 %v330
  %615 = vmatprep.subr.bf16.mxu0 0
  %616 = vmatpush2.bf16.msra.mxu0 %v345
  %617 = vmatprep.subr.bf16.mxu0 0
  %618 = vmatpush2.bf16.msra.mxu0 %v344
  %619 = vmatprep.subr.bf16.mxu0 0
  %620 = vmatpush2.bf16.msra.mxu0 %v343
  %621 = vmatprep.subr.bf16.mxu0 0
  %622 = vmatpush2.bf16.msra.mxu0 %v342
  %623 = vmatprep.subr.bf16.mxu0 0
  %624 = vmatpush2.bf16.msra.mxu0 %v341
  %625 = vmatprep.subr.bf16.mxu0 0
  %626 = vmatpush2.bf16.msra.mxu0 %v340
  %627 = vmatprep.subr.bf16.mxu0 0
  %628 = vmatpush2.bf16.msra.mxu0 %v339
  %629 = vmatprep.subr.bf16.mxu0 0
  %630 = vmatpush2.bf16.msra.mxu0 %v338
  %631 = vmatprep.mubr.bf16.mxu0 %v551
  %632 = vmatmul.mubr.bf16.gmra.mxu0 %v550
  %v633 = vpop.f32.mrf.mxu0
  %v634 = vadd.f32 %v594, %v633
  %v635 = vpop.f32.mrf.mxu0
  %v636 = vpop.f32.mrf.mxu0
  %v637 = vpop.f32.mrf.mxu0
  %638 = vdwg.mxu0
  %639 = vmatprep.subr.bf16.mxu0 0
  %640 = vmatpush1.bf16.msra.mxu0 0
  %641 = vmatprep.subr.bf16.mxu0 0
  %642 = vmatpush1.bf16.msra.mxu0 0
  %643 = vmatprep.subr.bf16.mxu0 0
  %644 = vmatpush1.bf16.msra.mxu0 0
  %645 = vmatprep.subr.bf16.mxu0 0
  %646 = vmatpush1.bf16.msra.mxu0 0
  %647 = vmatprep.subr.bf16.mxu0 0
  %648 = vmatpush1.bf16.msra.mxu0 %v349
  %649 = vmatprep.subr.bf16.mxu0 0
  %650 = vmatpush1.bf16.msra.mxu0 %v348
  %651 = vmatprep.subr.bf16.mxu0 0
  %652 = vmatpush1.bf16.msra.mxu0 %v347
  %653 = vmatprep.subr.bf16.mxu0 0
  %654 = vmatpush1.bf16.msra.mxu0 %v346
  %655 = vmatprep.subr.bf16.mxu0 0
  %656 = vmatpush2.bf16.msra.mxu0 0
  %657 = vmatprep.subr.bf16.mxu0 0
  %658 = vmatpush2.bf16.msra.mxu0 0
  %659 = vmatprep.subr.bf16.mxu0 0
  %660 = vmatpush2.bf16.msra.mxu0 0
  %661 = vmatprep.subr.bf16.mxu0 0
  %662 = vmatpush2.bf16.msra.mxu0 0
  %663 = vmatprep.subr.bf16.mxu0 0
  %664 = vmatpush2.bf16.msra.mxu0 0
  %665 = vmatprep.subr.bf16.mxu0 0
  %666 = vmatpush2.bf16.msra.mxu0 0
  %667 = vmatprep.subr.bf16.mxu0 0
  %668 = vmatpush2.bf16.msra.mxu0 0
  %669 = vmatprep.subr.bf16.mxu0 0
  %670 = vmatpush2.bf16.msra.mxu0 0
  %671 = vmatprep.mubr.bf16.mxu0 0
  %672 = vmatmul.mubr.bf16.gmra.mxu0 %v557
  %v673 = vpop.f32.mrf.mxu0
  %v674 = vadd.f32 %v634, %v673
  %v675 = vpop.f32.mrf.mxu0
  %v676 = vpop.f32.mrf.mxu0
  %v677 = vpop.f32.mrf.mxu0
  %678 = vdwg.mxu0
  %v679 = vmax.f32 %v505, %v674
  %s680 = scalar_lea.vmem %s0, 10
  %v681 = vld [vmem:[%s680] sm:$0x1f]
  %v683 = vcombine.high %v681, %v681
  %v685 = vunpack.c.l.s4 1966171168
  %v686 = vunpack.c.0.s8 %v685
  %v687 = vlaneseq
  %v688 = vshrl.u32 %v687, 7
  %v689 = vsub.s32 %v686, %v688
  %v690 = vrot.slane %v681, %v689
  %v692 = vunpack.c.l.s4 1966171168
  %v693 = vunpack.c.0.s8 %v692
  %v694 = vlaneseq
  %v695 = vshrl.u32 %v694, 7
  %v696 = vsub.s32 %v693, %v695
  %v697 = vrot.slane %v683, %v696
  %v698 = vcombine.high %v690, %v690
  %v700 = vunpack.c.l.s4 1966171168
  %v701 = vunpack.c.0.s8 %v700
  %v702 = vlaneseq
  %v703 = vshrl.u32 %v702, 7
  %v704 = vsub.s32 %v701, %v703
  %v705 = vrot.slane %v690, %v704
  %v707 = vunpack.c.l.s4 1966171168
  %v708 = vunpack.c.0.s8 %v707
  %v709 = vlaneseq
  %v710 = vshrl.u32 %v709, 7
  %v711 = vsub.s32 %v708, %v710
  %v712 = vrot.slane %v697, %v711
  %v714 = vunpack.c.l.s4 1966171168
  %v715 = vunpack.c.0.s8 %v714
  %v716 = vlaneseq
  %v717 = vshrl.u32 %v716, 7
  %v718 = vsub.s32 %v715, %v717
  %v719 = vrot.slane %v698, %v718
  %v720 = vcombine.high %v705, %v705
  %v721 = vcombine.high %v719, %v719
  %v727 = vsel %vm386, %v712, 0
  %729 = vmatprep.subr.bf16.mxu0 0
  %730 = vmatpush1.bf16.msra.mxu0 %v321
  %731 = vmatprep.subr.bf16.mxu0 0
  %732 = vmatpush1.bf16.msra.mxu0 %v320
  %733 = vmatprep.subr.bf16.mxu0 0
  %734 = vmatpush1.bf16.msra.mxu0 %v319
  %735 = vmatprep.subr.bf16.mxu0 0
  %736 = vmatpush1.bf16.msra.mxu0 %v318
  %737 = vmatprep.subr.bf16.mxu0 0
  %738 = vmatpush1.bf16.msra.mxu0 %v317
  %739 = vmatprep.subr.bf16.mxu0 0
  %740 = vmatpush1.bf16.msra.mxu0 %v316
  %741 = vmatprep.subr.bf16.mxu0 0
  %742 = vmatpush1.bf16.msra.mxu0 %v315
  %743 = vmatprep.subr.bf16.mxu0 0
  %744 = vmatpush1.bf16.msra.mxu0 %v314
  %745 = vmatprep.subr.bf16.mxu0 0
  %746 = vmatpush2.bf16.msra.mxu0 %v329
  %747 = vmatprep.subr.bf16.mxu0 0
  %748 = vmatpush2.bf16.msra.mxu0 %v328
  %749 = vmatprep.subr.bf16.mxu0 0
  %750 = vmatpush2.bf16.msra.mxu0 %v327
  %751 = vmatprep.subr.bf16.mxu0 0
  %752 = vmatpush2.bf16.msra.mxu0 %v326
  %753 = vmatprep.subr.bf16.mxu0 0
  %754 = vmatpush2.bf16.msra.mxu0 %v325
  %755 = vmatprep.subr.bf16.mxu0 0
  %756 = vmatpush2.bf16.msra.mxu0 %v324
  %757 = vmatprep.subr.bf16.mxu0 0
  %758 = vmatpush2.bf16.msra.mxu0 %v323
  %759 = vmatprep.subr.bf16.mxu0 0
  %760 = vmatpush2.bf16.msra.mxu0 %v322
  %761 = vmatprep.mubr.bf16.mxu0 %v719
  %762 = vmatmul.mubr.bf16.gmra.mxu0 %v705
  %v763 = vpop.f32.mrf.mxu0
  %v764 = vadd.f32 0.0, %v763
  %v765 = vpop.f32.mrf.mxu0
  %v766 = vpop.f32.mrf.mxu0
  %v767 = vpop.f32.mrf.mxu0
  %768 = vdwg.mxu0
  %769 = vmatprep.subr.bf16.mxu0 0
  %770 = vmatpush1.bf16.msra.mxu0 %v337
  %771 = vmatprep.subr.bf16.mxu0 0
  %772 = vmatpush1.bf16.msra.mxu0 %v336
  %773 = vmatprep.subr.bf16.mxu0 0
  %774 = vmatpush1.bf16.msra.mxu0 %v335
  %775 = vmatprep.subr.bf16.mxu0 0
  %776 = vmatpush1.bf16.msra.mxu0 %v334
  %777 = vmatprep.subr.bf16.mxu0 0
  %778 = vmatpush1.bf16.msra.mxu0 %v333
  %779 = vmatprep.subr.bf16.mxu0 0
  %780 = vmatpush1.bf16.msra.mxu0 %v332
  %781 = vmatprep.subr.bf16.mxu0 0
  %782 = vmatpush1.bf16.msra.mxu0 %v331
  %783 = vmatprep.subr.bf16.mxu0 0
  %784 = vmatpush1.bf16.msra.mxu0 %v330
  %785 = vmatprep.subr.bf16.mxu0 0
  %786 = vmatpush2.bf16.msra.mxu0 %v345
  %787 = vmatprep.subr.bf16.mxu0 0
  %788 = vmatpush2.bf16.msra.mxu0 %v344
  %789 = vmatprep.subr.bf16.mxu0 0
  %790 = vmatpush2.bf16.msra.mxu0 %v343
  %791 = vmatprep.subr.bf16.mxu0 0
  %792 = vmatpush2.bf16.msra.mxu0 %v342
  %793 = vmatprep.subr.bf16.mxu0 0
  %794 = vmatpush2.bf16.msra.mxu0 %v341
  %795 = vmatprep.subr.bf16.mxu0 0
  %796 = vmatpush2.bf16.msra.mxu0 %v340
  %797 = vmatprep.subr.bf16.mxu0 0
  %798 = vmatpush2.bf16.msra.mxu0 %v339
  %799 = vmatprep.subr.bf16.mxu0 0
  %800 = vmatpush2.bf16.msra.mxu0 %v338
  %801 = vmatprep.mubr.bf16.mxu0 %v721
  %802 = vmatmul.mubr.bf16.gmra.mxu0 %v720
  %v803 = vpop.f32.mrf.mxu0
  %v804 = vadd.f32 %v764, %v803
  %v805 = vpop.f32.mrf.mxu0
  %v806 = vpop.f32.mrf.mxu0
  %v807 = vpop.f32.mrf.mxu0
  %808 = vdwg.mxu0
  %809 = vmatprep.subr.bf16.mxu0 0
  %810 = vmatpush1.bf16.msra.mxu0 0
  %811 = vmatprep.subr.bf16.mxu0 0
  %812 = vmatpush1.bf16.msra.mxu0 0
  %813 = vmatprep.subr.bf16.mxu0 0
  %814 = vmatpush1.bf16.msra.mxu0 0
  %815 = vmatprep.subr.bf16.mxu0 0
  %816 = vmatpush1.bf16.msra.mxu0 0
  %817 = vmatprep.subr.bf16.mxu0 0
  %818 = vmatpush1.bf16.msra.mxu0 %v349
  %819 = vmatprep.subr.bf16.mxu0 0
  %820 = vmatpush1.bf16.msra.mxu0 %v348
  %821 = vmatprep.subr.bf16.mxu0 0
  %822 = vmatpush1.bf16.msra.mxu0 %v347
  %823 = vmatprep.subr.bf16.mxu0 0
  %824 = vmatpush1.bf16.msra.mxu0 %v346
  %825 = vmatprep.subr.bf16.mxu0 0
  %826 = vmatpush2.bf16.msra.mxu0 0
  %827 = vmatprep.subr.bf16.mxu0 0
  %828 = vmatpush2.bf16.msra.mxu0 0
  %829 = vmatprep.subr.bf16.mxu0 0
  %830 = vmatpush2.bf16.msra.mxu0 0
  %831 = vmatprep.subr.bf16.mxu0 0
  %832 = vmatpush2.bf16.msra.mxu0 0
  %833 = vmatprep.subr.bf16.mxu0 0
  %834 = vmatpush2.bf16.msra.mxu0 0
  %835 = vmatprep.subr.bf16.mxu0 0
  %836 = vmatpush2.bf16.msra.mxu0 0
  %837 = vmatprep.subr.bf16.mxu0 0
  %838 = vmatpush2.bf16.msra.mxu0 0
  %839 = vmatprep.subr.bf16.mxu0 0
  %840 = vmatpush2.bf16.msra.mxu0 0
  %841 = vmatprep.mubr.bf16.mxu0 0
  %842 = vmatmul.mubr.bf16.gmra.mxu0 %v727
  %v843 = vpop.f32.mrf.mxu0
  %v844 = vadd.f32 %v804, %v843
  %v845 = vpop.f32.mrf.mxu0
  %v846 = vpop.f32.mrf.mxu0
  %v847 = vpop.f32.mrf.mxu0
  %848 = vdwg.mxu0
  %v849 = vmax.f32 %v679, %v844
  %s850 = scalar_lea.vmem %s0, 15
  %v851 = vld [vmem:[%s850] sm:$0x1f]
  %v853 = vcombine.high %v851, %v851
  %v855 = vunpack.c.l.s4 1966171168
  %v856 = vunpack.c.0.s8 %v855
  %v857 = vlaneseq
  %v858 = vshrl.u32 %v857, 7
  %v859 = vsub.s32 %v856, %v858
  %v860 = vrot.slane %v851, %v859
  %v862 = vunpack.c.l.s4 1966171168
  %v863 = vunpack.c.0.s8 %v862
  %v864 = vlaneseq
  %v865 = vshrl.u32 %v864, 7
  %v866 = vsub.s32 %v863, %v865
  %v867 = vrot.slane %v853, %v866
  %v868 = vcombine.high %v860, %v860
  %v870 = vunpack.c.l.s4 1966171168
  %v871 = vunpack.c.0.s8 %v870
  %v872 = vlaneseq
  %v873 = vshrl.u32 %v872, 7
  %v874 = vsub.s32 %v871, %v873
  %v875 = vrot.slane %v860, %v874
  %v877 = vunpack.c.l.s4 1966171168
  %v878 = vunpack.c.0.s8 %v877
  %v879 = vlaneseq
  %v880 = vshrl.u32 %v879, 7
  %v881 = vsub.s32 %v878, %v880
  %v882 = vrot.slane %v867, %v881
  %v884 = vunpack.c.l.s4 1966171168
  %v885 = vunpack.c.0.s8 %v884
  %v886 = vlaneseq
  %v887 = vshrl.u32 %v886, 7
  %v888 = vsub.s32 %v885, %v887
  %v889 = vrot.slane %v868, %v888
  %v890 = vcombine.high %v875, %v875
  %v891 = vcombine.high %v889, %v889
  %v897 = vsel %vm386, %v882, 0
  %899 = vmatprep.subr.bf16.mxu0 0
  %900 = vmatpush1.bf16.msra.mxu0 %v321
  %901 = vmatprep.subr.bf16.mxu0 0
  %902 = vmatpush1.bf16.msra.mxu0 %v320
  %903 = vmatprep.subr.bf16.mxu0 0
  %904 = vmatpush1.bf16.msra.mxu0 %v319
  %905 = vmatprep.subr.bf16.mxu0 0
  %906 = vmatpush1.bf16.msra.mxu0 %v318
  %907 = vmatprep.subr.bf16.mxu0 0
  %908 = vmatpush1.bf16.msra.mxu0 %v317
  %909 = vmatprep.subr.bf16.mxu0 0
  %910 = vmatpush1.bf16.msra.mxu0 %v316
  %911 = vmatprep.subr.bf16.mxu0 0
  %912 = vmatpush1.bf16.msra.mxu0 %v315
  %913 = vmatprep.subr.bf16.mxu0 0
  %914 = vmatpush1.bf16.msra.mxu0 %v314
  %915 = vmatprep.subr.bf16.mxu0 0
  %916 = vmatpush2.bf16.msra.mxu0 %v329
  %917 = vmatprep.subr.bf16.mxu0 0
  %918 = vmatpush2.bf16.msra.mxu0 %v328
  %919 = vmatprep.subr.bf16.mxu0 0
  %920 = vmatpush2.bf16.msra.mxu0 %v327
  %921 = vmatprep.subr.bf16.mxu0 0
  %922 = vmatpush2.bf16.msra.mxu0 %v326
  %923 = vmatprep.subr.bf16.mxu0 0
  %924 = vmatpush2.bf16.msra.mxu0 %v325
  %925 = vmatprep.subr.bf16.mxu0 0
  %926 = vmatpush2.bf16.msra.mxu0 %v324
  %927 = vmatprep.subr.bf16.mxu0 0
  %928 = vmatpush2.bf16.msra.mxu0 %v323
  %929 = vmatprep.subr.bf16.mxu0 0
  %930 = vmatpush2.bf16.msra.mxu0 %v322
  %931 = vmatprep.mubr.bf16.mxu0 %v889
  %932 = vmatmul.mubr.bf16.gmra.mxu0 %v875
  %v933 = vpop.f32.mrf.mxu0
  %v934 = vadd.f32 0.0, %v933
  %v935 = vpop.f32.mrf.mxu0
  %v936 = vpop.f32.mrf.mxu0
  %v937 = vpop.f32.mrf.mxu0
  %938 = vdwg.mxu0
  %939 = vmatprep.subr.bf16.mxu0 0
  %940 = vmatpush1.bf16.msra.mxu0 %v337
  %941 = vmatprep.subr.bf16.mxu0 0
  %942 = vmatpush1.bf16.msra.mxu0 %v336
  %943 = vmatprep.subr.bf16.mxu0 0
  %944 = vmatpush1.bf16.msra.mxu0 %v335
  %945 = vmatprep.subr.bf16.mxu0 0
  %946 = vmatpush1.bf16.msra.mxu0 %v334
  %947 = vmatprep.subr.bf16.mxu0 0
  %948 = vmatpush1.bf16.msra.mxu0 %v333
  %949 = vmatprep.subr.bf16.mxu0 0
  %950 = vmatpush1.bf16.msra.mxu0 %v332
  %951 = vmatprep.subr.bf16.mxu0 0
  %952 = vmatpush1.bf16.msra.mxu0 %v331
  %953 = vmatprep.subr.bf16.mxu0 0
  %954 = vmatpush1.bf16.msra.mxu0 %v330
  %955 = vmatprep.subr.bf16.mxu0 0
  %956 = vmatpush2.bf16.msra.mxu0 %v345
  %957 = vmatprep.subr.bf16.mxu0 0
  %958 = vmatpush2.bf16.msra.mxu0 %v344
  %959 = vmatprep.subr.bf16.mxu0 0
  %960 = vmatpush2.bf16.msra.mxu0 %v343
  %961 = vmatprep.subr.bf16.mxu0 0
  %962 = vmatpush2.bf16.msra.mxu0 %v342
  %963 = vmatprep.subr.bf16.mxu0 0
  %964 = vmatpush2.bf16.msra.mxu0 %v341
  %965 = vmatprep.subr.bf16.mxu0 0
  %966 = vmatpush2.bf16.msra.mxu0 %v340
  %967 = vmatprep.subr.bf16.mxu0 0
  %968 = vmatpush2.bf16.msra.mxu0 %v339
  %969 = vmatprep.subr.bf16.mxu0 0
  %970 = vmatpush2.bf16.msra.mxu0 %v338
  %971 = vmatprep.mubr.bf16.mxu0 %v891
  %972 = vmatmul.mubr.bf16.gmra.mxu0 %v890
  %v973 = vpop.f32.mrf.mxu0
  %v974 = vadd.f32 %v934, %v973
  %v975 = vpop.f32.mrf.mxu0
  %v976 = vpop.f32.mrf.mxu0
  %v977 = vpop.f32.mrf.mxu0
  %978 = vdwg.mxu0
  %979 = vmatprep.subr.bf16.mxu0 0
  %980 = vmatpush1.bf16.msra.mxu0 0
  %981 = vmatprep.subr.bf16.mxu0 0
  %982 = vmatpush1.bf16.msra.mxu0 0
  %983 = vmatprep.subr.bf16.mxu0 0
  %984 = vmatpush1.bf16.msra.mxu0 0
  %985 = vmatprep.subr.bf16.mxu0 0
  %986 = vmatpush1.bf16.msra.mxu0 0
  %987 = vmatprep.subr.bf16.mxu0 0
  %988 = vmatpush1.bf16.msra.mxu0 %v349
  %989 = vmatprep.subr.bf16.mxu0 0
  %990 = vmatpush1.bf16.msra.mxu0 %v348
  %991 = vmatprep.subr.bf16.mxu0 0
  %992 = vmatpush1.bf16.msra.mxu0 %v347
  %993 = vmatprep.subr.bf16.mxu0 0
  %994 = vmatpush1.bf16.msra.mxu0 %v346
  %995 = vmatprep.subr.bf16.mxu0 0
  %996 = vmatpush2.bf16.msra.mxu0 0
  %997 = vmatprep.subr.bf16.mxu0 0
  %998 = vmatpush2.bf16.msra.mxu0 0
  %999 = vmatprep.subr.bf16.mxu0 0
  %1000 = vmatpush2.bf16.msra.mxu0 0
  %1001 = vmatprep.subr.bf16.mxu0 0
  %1002 = vmatpush2.bf16.msra.mxu0 0
  %1003 = vmatprep.subr.bf16.mxu0 0
  %1004 = vmatpush2.bf16.msra.mxu0 0
  %1005 = vmatprep.subr.bf16.mxu0 0
  %1006 = vmatpush2.bf16.msra.mxu0 0
  %1007 = vmatprep.subr.bf16.mxu0 0
  %1008 = vmatpush2.bf16.msra.mxu0 0
  %1009 = vmatprep.subr.bf16.mxu0 0
  %1010 = vmatpush2.bf16.msra.mxu0 0
  %1011 = vmatprep.mubr.bf16.mxu0 0
  %1012 = vmatmul.mubr.bf16.gmra.mxu0 %v897
  %v1013 = vpop.f32.mrf.mxu0
  %v1014 = vadd.f32 %v974, %v1013
  %v1015 = vpop.f32.mrf.mxu0
  %v1016 = vpop.f32.mrf.mxu0
  %v1017 = vpop.f32.mrf.mxu0
  %1018 = vdwg.mxu0
  %v1019 = vmax.f32 %v849, %v1014
  %v1020 = vld [vmem:[%s3] sm:$0x1]
  %v1022 = vlaneseq
  %v1023 = vshrl.u32 %v1022, 7
  %v1024 = vsub.s32 0, %v1023
  %v1025 = vrot.slane %v1020, %v1024
  %v1027 = vadd.f32 %v1019, %v1025
  %vm1028 = vcmp.gt.f32.partialorder %v1027, 0.0
  %v1029 = vmul.f32 %v1027, 0.01
  %v1030 = vsel %vm1028, %v1027, %v1029
  %v1031 = vpack.c.bf16 %v1030, %v1030
  %v1032 = vld [vmem:[%s4] sm:$0xff]
  %v1033 = vld [vmem:[%s4 + $0x8] sm:$0xff]
  %v1034 = vld [vmem:[%s4 + $0x10] sm:$0xff]
  %v1035 = vld [vmem:[%s4 + $0x18] sm:$0xff]
  %v1036 = vld [vmem:[%s4 + $0x20] sm:$0xff]
  %v1037 = vld [vmem:[%s4 + $0x28] sm:$0xff]
  %v1038 = vld [vmem:[%s4 + $0x30] sm:$0xff]
  %v1039 = vld [vmem:[%s4 + $0x38] sm:$0xff]
  %v1040 = vld [vmem:[%s4 + $0x40] sm:$0xff]
  %v1041 = vld [vmem:[%s4 + $0x48] sm:$0xff]
  %v1042 = vld [vmem:[%s4 + $0x50] sm:$0xff]
  %v1043 = vld [vmem:[%s4 + $0x58] sm:$0xff]
  %v1044 = vld [vmem:[%s4 + $0x60] sm:$0xff]
  %v1045 = vld [vmem:[%s4 + $0x68] sm:$0xff]
  %v1046 = vld [vmem:[%s4 + $0x70] sm:$0xff]
  %v1047 = vld [vmem:[%s4 + $0x78] sm:$0xff]
  %v1048 = vld [vmem:[%s4 + $0x80] sm:$0xff]
  %v1049 = vld [vmem:[%s4 + $0x88] sm:$0xff]
  %v1050 = vld [vmem:[%s4 + $0x90] sm:$0xff]
  %v1051 = vld [vmem:[%s4 + $0x98] sm:$0xff]
  %v1052 = vld [vmem:[%s4 + $0xa0] sm:$0xff]
  %v1053 = vld [vmem:[%s4 + $0xa8] sm:$0xff]
  %v1054 = vld [vmem:[%s4 + $0xb0] sm:$0xff]
  %v1055 = vld [vmem:[%s4 + $0xb8] sm:$0xff]
  %v1056 = vld [vmem:[%s4 + $0xc0] sm:$0xff]
  %v1057 = vld [vmem:[%s4 + $0xc8] sm:$0xff]
  %v1058 = vld [vmem:[%s4 + $0xd0] sm:$0xff]
  %v1059 = vld [vmem:[%s4 + $0xd8] sm:$0xff]
  %v1060 = vld [vmem:[%s4 + $0xe0] sm:$0xff]
  %v1061 = vld [vmem:[%s4 + $0xe8] sm:$0xff]
  %v1062 = vld [vmem:[%s4 + $0xf0] sm:$0xff]
  %v1063 = vld [vmem:[%s4 + $0xf8] sm:$0xff]
  %v1064 = vld [vmem:[%s1] sm:$0x1]
  %v1065 = vld [vmem:[%s5] sm:$0xff]
  %v1067 = vcombine.high %v1065, %v1065
  %v1069 = vunpack.c.l.s4 1983009808
  %v1070 = vunpack.c.0.s8 %v1069
  %v1071 = vlaneseq
  %v1072 = vshrl.u32 %v1071, 7
  %v1073 = vsub.s32 %v1070, %v1072
  %v1074 = vrot.slane %v1065, %v1073
  %v1076 = vunpack.c.l.s4 1983009808
  %v1077 = vunpack.c.0.s8 %v1076
  %v1078 = vlaneseq
  %v1079 = vshrl.u32 %v1078, 7
  %v1080 = vsub.s32 %v1077, %v1079
  %v1081 = vrot.slane %v1067, %v1080
  %v1082 = vcombine.high %v1074, %v1074
  %v1083 = vcombine.high %v1081, %v1081
  %vm1084 = vcmask 31744
  %v1086 = vsel %vm1084, %v1064, 0
  %vm1088 = vcmask 1041408
  %v1090 = vsel %vm1088, %v1074, 0
  %v1093 = vsel %vm1088, %v1082, 0
  %v1096 = vsel %vm1088, %v1081, 0
  %v1099 = vsel %vm1088, %v1083, 0
  %1101 = vmatprep.subr.bf16.mxu0 0
  %1102 = vmatpush1.bf16.msra.mxu0 0
  %1103 = vmatprep.subr.bf16.mxu0 0
  %1104 = vmatpush1.bf16.msra.mxu0 0
  %1105 = vmatprep.subr.bf16.mxu0 0
  %1106 = vmatpush1.bf16.msra.mxu0 0
  %1107 = vmatprep.subr.bf16.mxu0 0
  %1108 = vmatpush1.bf16.msra.mxu0 0
  %1109 = vmatprep.subr.bf16.mxu0 0
  %1110 = vmatpush1.bf16.msra.mxu0 0
  %1111 = vmatprep.subr.bf16.mxu0 0
  %1112 = vmatpush1.bf16.msra.mxu0 0
  %1113 = vmatprep.subr.bf16.mxu0 0
  %1114 = vmatpush1.bf16.msra.mxu0 0
  %1115 = vmatprep.subr.bf16.mxu0 %v1093
  %1116 = vmatpush1.bf16.msra.mxu0 %v1090
  %1117 = vmatprep.subr.bf16.mxu0 0
  %1118 = vmatpush2.bf16.msra.mxu0 0
  %1119 = vmatprep.subr.bf16.mxu0 0
  %1120 = vmatpush2.bf16.msra.mxu0 0
  %1121 = vmatprep.subr.bf16.mxu0 0
  %1122 = vmatpush2.bf16.msra.mxu0 0
  %1123 = vmatprep.subr.bf16.mxu0 0
  %1124 = vmatpush2.bf16.msra.mxu0 0
  %1125 = vmatprep.subr.bf16.mxu0 0
  %1126 = vmatpush2.bf16.msra.mxu0 0
  %1127 = vmatprep.subr.bf16.mxu0 0
  %1128 = vmatpush2.bf16.msra.mxu0 0
  %1129 = vmatprep.subr.bf16.mxu0 0
  %1130 = vmatpush2.bf16.msra.mxu0 0
  %1131 = vmatprep.subr.bf16.mxu0 0
  %1132 = vmatpush2.bf16.msra.mxu0 0
  %1133 = vmatprep.mubr.bf16.mxu0 0
  %1134 = vmatmul.mubr.bf16.gmra.mxu0 %v1086
  %v1135 = vpop.f32.mrf.mxu0
  %v1136 = vadd.f32 0.0, %v1135
  %v1137 = vpop.f32.mrf.mxu0
  %v1138 = vadd.f32 0.0, %v1137
  %v1139 = vpop.f32.mrf.mxu0
  %v1140 = vpop.f32.mrf.mxu0
  %1141 = vdwg.mxu0
  %1142 = vmatprep.subr.bf16.mxu0 0
  %1143 = vmatpush1.bf16.msra.mxu0 0
  %1144 = vmatprep.subr.bf16.mxu0 0
  %1145 = vmatpush1.bf16.msra.mxu0 0
  %1146 = vmatprep.subr.bf16.mxu0 0
  %1147 = vmatpush1.bf16.msra.mxu0 0
  %1148 = vmatprep.subr.bf16.mxu0 0
  %1149 = vmatpush1.bf16.msra.mxu0 0
  %1150 = vmatprep.subr.bf16.mxu0 0
  %1151 = vmatpush1.bf16.msra.mxu0 0
  %1152 = vmatprep.subr.bf16.mxu0 0
  %1153 = vmatpush1.bf16.msra.mxu0 0
  %1154 = vmatprep.subr.bf16.mxu0 0
  %1155 = vmatpush1.bf16.msra.mxu0 0
  %1156 = vmatprep.subr.bf16.mxu0 %v1099
  %1157 = vmatpush1.bf16.msra.mxu0 %v1096
  %1158 = vmatprep.subr.bf16.mxu0 0
  %1159 = vmatpush2.bf16.msra.mxu0 0
  %1160 = vmatprep.subr.bf16.mxu0 0
  %1161 = vmatpush2.bf16.msra.mxu0 0
  %1162 = vmatprep.subr.bf16.mxu0 0
  %1163 = vmatpush2.bf16.msra.mxu0 0
  %1164 = vmatprep.subr.bf16.mxu0 0
  %1165 = vmatpush2.bf16.msra.mxu0 0
  %1166 = vmatprep.subr.bf16.mxu0 0
  %1167 = vmatpush2.bf16.msra.mxu0 0
  %1168 = vmatprep.subr.bf16.mxu0 0
  %1169 = vmatpush2.bf16.msra.mxu0 0
  %1170 = vmatprep.subr.bf16.mxu0 0
  %1171 = vmatpush2.bf16.msra.mxu0 0
  %1172 = vmatprep.subr.bf16.mxu0 0
  %1173 = vmatpush2.bf16.msra.mxu0 0
  %1174 = vmatprep.mubr.bf16.mxu0 0
  %1175 = vmatmul.mubr.bf16.gmra.mxu0 %v1086
  %v1176 = vpop.f32.mrf.mxu0
  %v1177 = vadd.f32 0.0, %v1176
  %v1178 = vpop.f32.mrf.mxu0
  %v1179 = vadd.f32 0.0, %v1178
  %v1180 = vpop.f32.mrf.mxu0
  %v1181 = vpop.f32.mrf.mxu0
  %1182 = vdwg.mxu0
  %v1215 = vunpack.c.l.b16 %v1032
  %v1216 = vunpack.c.h.b16 %v1032
  %v1217 = vunpack.c.l.b16 %v1033
  %v1218 = vunpack.c.h.b16 %v1033
  %v1219 = vunpack.c.l.b16 %v1034
  %v1220 = vunpack.c.h.b16 %v1034
  %v1221 = vunpack.c.l.b16 %v1035
  %v1222 = vunpack.c.h.b16 %v1035
  %v1223 = vunpack.c.l.b16 %v1036
  %v1224 = vunpack.c.h.b16 %v1036
  %v1225 = vunpack.c.l.b16 %v1037
  %v1226 = vunpack.c.h.b16 %v1037
  %v1227 = vunpack.c.l.b16 %v1038
  %v1228 = vunpack.c.h.b16 %v1038
  %v1229 = vunpack.c.l.b16 %v1039
  %v1230 = vunpack.c.h.b16 %v1039
  %v1231 = vunpack.c.l.b16 %v1040
  %v1232 = vunpack.c.h.b16 %v1040
  %v1233 = vunpack.c.l.b16 %v1041
  %v1234 = vunpack.c.h.b16 %v1041
  %v1235 = vunpack.c.l.b16 %v1042
  %v1236 = vunpack.c.h.b16 %v1042
  %v1237 = vunpack.c.l.b16 %v1043
  %v1238 = vunpack.c.h.b16 %v1043
  %v1239 = vunpack.c.l.b16 %v1044
  %v1240 = vunpack.c.h.b16 %v1044
  %v1241 = vunpack.c.l.b16 %v1045
  %v1242 = vunpack.c.h.b16 %v1045
  %v1243 = vunpack.c.l.b16 %v1046
  %v1244 = vunpack.c.h.b16 %v1046
  %v1245 = vunpack.c.l.b16 %v1047
  %v1246 = vunpack.c.h.b16 %v1047
  %v1247 = vunpack.c.l.b16 %v1048
  %v1248 = vunpack.c.h.b16 %v1048
  %v1249 = vunpack.c.l.b16 %v1049
  %v1250 = vunpack.c.h.b16 %v1049
  %v1251 = vunpack.c.l.b16 %v1050
  %v1252 = vunpack.c.h.b16 %v1050
  %v1253 = vunpack.c.l.b16 %v1051
  %v1254 = vunpack.c.h.b16 %v1051
  %v1255 = vunpack.c.l.b16 %v1052
  %v1256 = vunpack.c.h.b16 %v1052
  %v1257 = vunpack.c.l.b16 %v1053
  %v1258 = vunpack.c.h.b16 %v1053
  %v1259 = vunpack.c.l.b16 %v1054
  %v1260 = vunpack.c.h.b16 %v1054
  %v1261 = vunpack.c.l.b16 %v1055
  %v1262 = vunpack.c.h.b16 %v1055
  %v1263 = vunpack.c.l.b16 %v1056
  %v1264 = vunpack.c.h.b16 %v1056
  %v1265 = vunpack.c.l.b16 %v1057
  %v1266 = vunpack.c.h.b16 %v1057
  %v1267 = vunpack.c.l.b16 %v1058
  %v1268 = vunpack.c.h.b16 %v1058
  %v1269 = vunpack.c.l.b16 %v1059
  %v1270 = vunpack.c.h.b16 %v1059
  %v1271 = vunpack.c.l.b16 %v1060
  %v1272 = vunpack.c.h.b16 %v1060
  %v1273 = vunpack.c.l.b16 %v1061
  %v1274 = vunpack.c.h.b16 %v1061
  %v1275 = vunpack.c.l.b16 %v1062
  %v1276 = vunpack.c.h.b16 %v1062
  %v1277 = vunpack.c.l.b16 %v1063
  %v1278 = vunpack.c.h.b16 %v1063
  %v1279 = vpack.c.b16 %v1219, %v1215
  %v1280 = vpack.c.b16 %v1220, %v1216
  %v1281 = vpack.c.b16 %v1221, %v1217
  %v1282 = vpack.c.b16 %v1222, %v1218
  %v1283 = vpack.c.b16 %v1227, %v1223
  %v1284 = vpack.c.b16 %v1228, %v1224
  %v1285 = vpack.c.b16 %v1229, %v1225
  %v1286 = vpack.c.b16 %v1230, %v1226
  %v1287 = vpack.c.b16 %v1235, %v1231
  %v1288 = vpack.c.b16 %v1236, %v1232
  %v1289 = vpack.c.b16 %v1237, %v1233
  %v1290 = vpack.c.b16 %v1238, %v1234
  %v1291 = vpack.c.b16 %v1243, %v1239
  %v1292 = vpack.c.b16 %v1244, %v1240
  %v1293 = vpack.c.b16 %v1245, %v1241
  %v1294 = vpack.c.b16 %v1246, %v1242
  %v1295 = vpack.c.b16 %v1251, %v1247
  %v1296 = vpack.c.b16 %v1252, %v1248
  %v1297 = vpack.c.b16 %v1253, %v1249
  %v1298 = vpack.c.b16 %v1254, %v1250
  %v1299 = vpack.c.b16 %v1259, %v1255
  %v1300 = vpack.c.b16 %v1260, %v1256
  %v1301 = vpack.c.b16 %v1261, %v1257
  %v1302 = vpack.c.b16 %v1262, %v1258
  %v1303 = vpack.c.b16 %v1267, %v1263
  %v1304 = vpack.c.b16 %v1268, %v1264
  %v1305 = vpack.c.b16 %v1269, %v1265
  %v1306 = vpack.c.b16 %v1270, %v1266
  %v1307 = vpack.c.b16 %v1275, %v1271
  %v1308 = vpack.c.b16 %v1276, %v1272
  %v1309 = vpack.c.b16 %v1277, %v1273
  %v1310 = vpack.c.b16 %v1278, %v1274
  %1343 = vmatprep.subr.bf16.mxu0 %v1308
  %1344 = vmatpush1.bf16.msra.mxu0 %v1307
  %1345 = vmatprep.subr.bf16.mxu0 %v1304
  %1346 = vmatpush1.bf16.msra.mxu0 %v1303
  %1347 = vmatprep.subr.bf16.mxu0 %v1300
  %1348 = vmatpush1.bf16.msra.mxu0 %v1299
  %1349 = vmatprep.subr.bf16.mxu0 %v1296
  %1350 = vmatpush1.bf16.msra.mxu0 %v1295
  %1351 = vmatprep.subr.bf16.mxu0 %v1292
  %1352 = vmatpush1.bf16.msra.mxu0 %v1291
  %1353 = vmatprep.subr.bf16.mxu0 %v1288
  %1354 = vmatpush1.bf16.msra.mxu0 %v1287
  %1355 = vmatprep.subr.bf16.mxu0 %v1284
  %1356 = vmatpush1.bf16.msra.mxu0 %v1283
  %1357 = vmatprep.subr.bf16.mxu0 %v1280
  %1358 = vmatpush1.bf16.msra.mxu0 %v1279
  %1359 = vmatprep.subr.bf16.mxu0 0
  %1360 = vmatpush2.bf16.msra.mxu0 0
  %1361 = vmatprep.subr.bf16.mxu0 0
  %1362 = vmatpush2.bf16.msra.mxu0 0
  %1363 = vmatprep.subr.bf16.mxu0 0
  %1364 = vmatpush2.bf16.msra.mxu0 0
  %1365 = vmatprep.subr.bf16.mxu0 0
  %1366 = vmatpush2.bf16.msra.mxu0 0
  %1367 = vmatprep.subr.bf16.mxu0 0
  %1368 = vmatpush2.bf16.msra.mxu0 0
  %1369 = vmatprep.subr.bf16.mxu0 0
  %1370 = vmatpush2.bf16.msra.mxu0 0
  %1371 = vmatprep.subr.bf16.mxu0 0
  %1372 = vmatpush2.bf16.msra.mxu0 0
  %1373 = vmatprep.subr.bf16.mxu0 0
  %1374 = vmatpush2.bf16.msra.mxu0 0
  %1375 = vmatprep.mubr.bf16.mxu0 0
  %1376 = vmatmul.mubr.bf16.gmra.mxu0 %v1031
  %v1377 = vpop.f32.mrf.mxu0
  %v1378 = vadd.f32 %v1136, %v1377
  %v1379 = vpop.f32.mrf.mxu0
  %v1380 = vadd.f32 %v1138, %v1379
  %v1381 = vpop.f32.mrf.mxu0
  %v1382 = vpop.f32.mrf.mxu0
  %1383 = vdwg.mxu0
  %1384 = vmatprep.subr.bf16.mxu0 %v1310
  %1385 = vmatpush1.bf16.msra.mxu0 %v1309
  %1386 = vmatprep.subr.bf16.mxu0 %v1306
  %1387 = vmatpush1.bf16.msra.mxu0 %v1305
  %1388 = vmatprep.subr.bf16.mxu0 %v1302
  %1389 = vmatpush1.bf16.msra.mxu0 %v1301
  %1390 = vmatprep.subr.bf16.mxu0 %v1298
  %1391 = vmatpush1.bf16.msra.mxu0 %v1297
  %1392 = vmatprep.subr.bf16.mxu0 %v1294
  %1393 = vmatpush1.bf16.msra.mxu0 %v1293
  %1394 = vmatprep.subr.bf16.mxu0 %v1290
  %1395 = vmatpush1.bf16.msra.mxu0 %v1289
  %1396 = vmatprep.subr.bf16.mxu0 %v1286
  %1397 = vmatpush1.bf16.msra.mxu0 %v1285
  %1398 = vmatprep.subr.bf16.mxu0 %v1282
  %1399 = vmatpush1.bf16.msra.mxu0 %v1281
  %1400 = vmatprep.subr.bf16.mxu0 0
  %1401 = vmatpush2.bf16.msra.mxu0 0
  %1402 = vmatprep.subr.bf16.mxu0 0
  %1403 = vmatpush2.bf16.msra.mxu0 0
  %1404 = vmatprep.subr.bf16.mxu0 0
  %1405 = vmatpush2.bf16.msra.mxu0 0
  %1406 = vmatprep.subr.bf16.mxu0 0
  %1407 = vmatpush2.bf16.msra.mxu0 0
  %1408 = vmatprep.subr.bf16.mxu0 0
  %1409 = vmatpush2.bf16.msra.mxu0 0
  %1410 = vmatprep.subr.bf16.mxu0 0
  %1411 = vmatpush2.bf16.msra.mxu0 0
  %1412 = vmatprep.subr.bf16.mxu0 0
  %1413 = vmatpush2.bf16.msra.mxu0 0
  %1414 = vmatprep.subr.bf16.mxu0 0
  %1415 = vmatpush2.bf16.msra.mxu0 0
  %1416 = vmatprep.mubr.bf16.mxu0 0
  %1417 = vmatmul.mubr.bf16.gmra.mxu0 %v1031
  %v1418 = vpop.f32.mrf.mxu0
  %v1419 = vadd.f32 %v1177, %v1418
  %v1420 = vpop.f32.mrf.mxu0
  %v1421 = vadd.f32 %v1179, %v1420
  %v1422 = vpop.f32.mrf.mxu0
  %v1423 = vpop.f32.mrf.mxu0
  %1424 = vdwg.mxu0
  %v1425 = vld [vmem:[%s6] sm:$0xf]
  %v1427 = vlaneseq
  %v1428 = vshrl.u32 %v1427, 7
  %v1429 = vsub.s32 0, %v1428
  %v1430 = vrot.slane %v1425, %v1429
  %v1431 = vlaneseq
  %v1432 = vshrl.u32 %v1431, 7
  %v1433 = vsub.s32 1, %v1432
  %v1434 = vrot.slane %v1425, %v1433
  %v1435 = vlaneseq
  %v1436 = vshrl.u32 %v1435, 7
  %v1437 = vsub.s32 2, %v1436
  %v1438 = vrot.slane %v1425, %v1437
  %v1439 = vlaneseq
  %v1440 = vshrl.u32 %v1439, 7
  %v1441 = vsub.s32 3, %v1440
  %v1442 = vrot.slane %v1425, %v1441
  %v1447 = vadd.f32 %v1378, %v1430
  %v1448 = vadd.f32 %v1380, %v1434
  %v1449 = vadd.f32 %v1419, %v1438
  %v1450 = vadd.f32 %v1421, %v1442
  %vm1451 = vcmp.gt.f32.partialorder %v1447, 0.0
  %vm1452 = vcmp.gt.f32.partialorder %v1448, 0.0
  %vm1453 = vcmp.gt.f32.partialorder %v1449, 0.0
  %vm1454 = vcmp.gt.f32.partialorder %v1450, 0.0
  %v1455 = vmul.f32 %v1447, 0.01
  %v1456 = vmul.f32 %v1448, 0.01
  %v1457 = vmul.f32 %v1449, 0.01
  %v1458 = vmul.f32 %v1450, 0.01
  %v1459 = vsel %vm1451, %v1447, %v1455
  %v1460 = vsel %vm1452, %v1448, %v1456
  %v1461 = vsel %vm1453, %v1449, %v1457
  %v1462 = vsel %vm1454, %v1450, %v1458
  %v1463 = vpack.c.bf16 %v1459, %v1459
  %v1464 = vpack.c.bf16 %v1460, %v1460
  %v1465 = vpack.c.bf16 %v1461, %v1461
  %v1466 = vpack.c.bf16 %v1462, %v1462
  %v1467 = vld [vmem:[%s7] sm:$0xf]
  %v1468 = vld [vmem:[%s7 + $0x4] sm:$0xf]
  %v1469 = vld [vmem:[%s7 + $0x8] sm:$0xf]
  %v1470 = vld [vmem:[%s7 + $0xc] sm:$0xf]
  %v1471 = vld [vmem:[%s7 + $0x10] sm:$0xf]
  %v1472 = vld [vmem:[%s7 + $0x14] sm:$0xf]
  %v1473 = vld [vmem:[%s7 + $0x18] sm:$0xf]
  %v1474 = vld [vmem:[%s7 + $0x1c] sm:$0xf]
  %v1475 = vld [vmem:[%s7 + $0x20] sm:$0xf]
  %v1476 = vld [vmem:[%s7 + $0x24] sm:$0xf]
  %v1477 = vld [vmem:[%s7 + $0x28] sm:$0xf]
  %v1478 = vld [vmem:[%s7 + $0x2c] sm:$0xf]
  %v1479 = vld [vmem:[%s7 + $0x30] sm:$0xf]
  %v1480 = vld [vmem:[%s7 + $0x34] sm:$0xf]
  %v1481 = vld [vmem:[%s7 + $0x38] sm:$0xf]
  %v1482 = vld [vmem:[%s7 + $0x3c] sm:$0xf]
  %v1483 = vld [vmem:[%s7 + $0x40] sm:$0xf]
  %v1484 = vld [vmem:[%s7 + $0x44] sm:$0xf]
  %v1485 = vld [vmem:[%s7 + $0x48] sm:$0xf]
  %v1486 = vld [vmem:[%s7 + $0x4c] sm:$0xf]
  %v1487 = vld [vmem:[%s7 + $0x50] sm:$0xf]
  %v1488 = vld [vmem:[%s7 + $0x54] sm:$0xf]
  %v1489 = vld [vmem:[%s7 + $0x58] sm:$0xf]
  %v1490 = vld [vmem:[%s7 + $0x5c] sm:$0xf]
  %v1491 = vld [vmem:[%s7 + $0x60] sm:$0xf]
  %v1492 = vld [vmem:[%s7 + $0x64] sm:$0xf]
  %v1493 = vld [vmem:[%s7 + $0x68] sm:$0xf]
  %v1494 = vld [vmem:[%s7 + $0x6c] sm:$0xf]
  %v1495 = vld [vmem:[%s7 + $0x70] sm:$0xf]
  %v1496 = vld [vmem:[%s7 + $0x74] sm:$0xf]
  %v1497 = vld [vmem:[%s7 + $0x78] sm:$0xf]
  %v1498 = vld [vmem:[%s7 + $0x7c] sm:$0xf]
  %v1499 = vld [vmem:[%s7 + $0x80] sm:$0xf]
  %v1500 = vld [vmem:[%s7 + $0x84] sm:$0xf]
  %v1501 = vld [vmem:[%s7 + $0x88] sm:$0xf]
  %v1502 = vld [vmem:[%s7 + $0x8c] sm:$0xf]
  %v1503 = vld [vmem:[%s7 + $0x90] sm:$0xf]
  %v1504 = vld [vmem:[%s7 + $0x94] sm:$0xf]
  %v1505 = vld [vmem:[%s7 + $0x98] sm:$0xf]
  %v1506 = vld [vmem:[%s7 + $0x9c] sm:$0xf]
  %v1507 = vld [vmem:[%s7 + $0xa0] sm:$0xf]
  %v1508 = vld [vmem:[%s7 + $0xa4] sm:$0xf]
  %v1509 = vld [vmem:[%s7 + $0xa8] sm:$0xf]
  %v1510 = vld [vmem:[%s7 + $0xac] sm:$0xf]
  %v1511 = vld [vmem:[%s7 + $0xb0] sm:$0xf]
  %v1512 = vld [vmem:[%s7 + $0xb4] sm:$0xf]
  %v1513 = vld [vmem:[%s7 + $0xb8] sm:$0xf]
  %v1514 = vld [vmem:[%s7 + $0xbc] sm:$0xf]
  %v1515 = vld [vmem:[%s7 + $0xc0] sm:$0xf]
  %v1516 = vld [vmem:[%s7 + $0xc4] sm:$0xf]
  %v1517 = vld [vmem:[%s7 + $0xc8] sm:$0xf]
  %v1518 = vld [vmem:[%s7 + $0xcc] sm:$0xf]
  %v1519 = vld [vmem:[%s7 + $0xd0] sm:$0xf]
  %v1520 = vld [vmem:[%s7 + $0xd4] sm:$0xf]
  %v1521 = vld [vmem:[%s7 + $0xd8] sm:$0xf]
  %v1522 = vld [vmem:[%s7 + $0xdc] sm:$0xf]
  %v1523 = vld [vmem:[%s7 + $0xe0] sm:$0xf]
  %v1524 = vld [vmem:[%s7 + $0xe4] sm:$0xf]
  %v1525 = vld [vmem:[%s7 + $0xe8] sm:$0xf]
  %v1526 = vld [vmem:[%s7 + $0xec] sm:$0xf]
  %v1527 = vld [vmem:[%s7 + $0xf0] sm:$0xf]
  %v1528 = vld [vmem:[%s7 + $0xf4] sm:$0xf]
  %v1529 = vld [vmem:[%s7 + $0xf8] sm:$0xf]
  %v1530 = vld [vmem:[%s7 + $0xfc] sm:$0xf]
  %v1531 = vld [vmem:[%s8] sm:$0x1]
  %v1533 = vlaneseq
  %v1534 = vshrl.u32 %v1533, 7
  %v1535 = vsub.s32 0, %v1534
  %v1536 = vrot.slane %v1531, %v1535
  %v1602 = vunpack.c.l.b16 %v1467
  %v1603 = vunpack.c.l.b16 %v1468
  %v1604 = vunpack.c.l.b16 %v1469
  %v1605 = vunpack.c.l.b16 %v1470
  %v1606 = vunpack.c.l.b16 %v1471
  %v1607 = vunpack.c.l.b16 %v1472
  %v1608 = vunpack.c.l.b16 %v1473
  %v1609 = vunpack.c.l.b16 %v1474
  %v1610 = vunpack.c.l.b16 %v1475
  %v1611 = vunpack.c.l.b16 %v1476
  %v1612 = vunpack.c.l.b16 %v1477
  %v1613 = vunpack.c.l.b16 %v1478
  %v1614 = vunpack.c.l.b16 %v1479
  %v1615 = vunpack.c.l.b16 %v1480
  %v1616 = vunpack.c.l.b16 %v1481
  %v1617 = vunpack.c.l.b16 %v1482
  %v1618 = vunpack.c.l.b16 %v1483
  %v1619 = vunpack.c.l.b16 %v1484
  %v1620 = vunpack.c.l.b16 %v1485
  %v1621 = vunpack.c.l.b16 %v1486
  %v1622 = vunpack.c.l.b16 %v1487
  %v1623 = vunpack.c.l.b16 %v1488
  %v1624 = vunpack.c.l.b16 %v1489
  %v1625 = vunpack.c.l.b16 %v1490
  %v1626 = vunpack.c.l.b16 %v1491
  %v1627 = vunpack.c.l.b16 %v1492
  %v1628 = vunpack.c.l.b16 %v1493
  %v1629 = vunpack.c.l.b16 %v1494
  %v1630 = vunpack.c.l.b16 %v1495
  %v1631 = vunpack.c.l.b16 %v1496
  %v1632 = vunpack.c.l.b16 %v1497
  %v1633 = vunpack.c.l.b16 %v1498
  %v1634 = vunpack.c.l.b16 %v1499
  %v1635 = vunpack.c.l.b16 %v1500
  %v1636 = vunpack.c.l.b16 %v1501
  %v1637 = vunpack.c.l.b16 %v1502
  %v1638 = vunpack.c.l.b16 %v1503
  %v1639 = vunpack.c.l.b16 %v1504
  %v1640 = vunpack.c.l.b16 %v1505
  %v1641 = vunpack.c.l.b16 %v1506
  %v1642 = vunpack.c.l.b16 %v1507
  %v1643 = vunpack.c.l.b16 %v1508
  %v1644 = vunpack.c.l.b16 %v1509
  %v1645 = vunpack.c.l.b16 %v1510
  %v1646 = vunpack.c.l.b16 %v1511
  %v1647 = vunpack.c.l.b16 %v1512
  %v1648 = vunpack.c.l.b16 %v1513
  %v1649 = vunpack.c.l.b16 %v1514
  %v1650 = vunpack.c.l.b16 %v1515
  %v1651 = vunpack.c.l.b16 %v1516
  %v1652 = vunpack.c.l.b16 %v1517
  %v1653 = vunpack.c.l.b16 %v1518
  %v1654 = vunpack.c.l.b16 %v1519
  %v1655 = vunpack.c.l.b16 %v1520
  %v1656 = vunpack.c.l.b16 %v1521
  %v1657 = vunpack.c.l.b16 %v1522
  %v1658 = vunpack.c.l.b16 %v1523
  %v1659 = vunpack.c.l.b16 %v1524
  %v1660 = vunpack.c.l.b16 %v1525
  %v1661 = vunpack.c.l.b16 %v1526
  %v1662 = vunpack.c.l.b16 %v1527
  %v1663 = vunpack.c.l.b16 %v1528
  %v1664 = vunpack.c.l.b16 %v1529
  %v1665 = vunpack.c.l.b16 %v1530
  %v1666 = vpack.c.b16 %v1603, %v1602
  %v1667 = vpack.c.b16 %v1605, %v1604
  %v1668 = vpack.c.b16 %v1607, %v1606
  %v1669 = vpack.c.b16 %v1609, %v1608
  %v1670 = vpack.c.b16 %v1611, %v1610
  %v1671 = vpack.c.b16 %v1613, %v1612
  %v1672 = vpack.c.b16 %v1615, %v1614
  %v1673 = vpack.c.b16 %v1617, %v1616
  %v1674 = vpack.c.b16 %v1619, %v1618
  %v1675 = vpack.c.b16 %v1621, %v1620
  %v1676 = vpack.c.b16 %v1623, %v1622
  %v1677 = vpack.c.b16 %v1625, %v1624
  %v1678 = vpack.c.b16 %v1627, %v1626
  %v1679 = vpack.c.b16 %v1629, %v1628
  %v1680 = vpack.c.b16 %v1631, %v1630
  %v1681 = vpack.c.b16 %v1633, %v1632
  %v1682 = vpack.c.b16 %v1635, %v1634
  %v1683 = vpack.c.b16 %v1637, %v1636
  %v1684 = vpack.c.b16 %v1639, %v1638
  %v1685 = vpack.c.b16 %v1641, %v1640
  %v1686 = vpack.c.b16 %v1643, %v1642
  %v1687 = vpack.c.b16 %v1645, %v1644
  %v1688 = vpack.c.b16 %v1647, %v1646
  %v1689 = vpack.c.b16 %v1649, %v1648
  %v1690 = vpack.c.b16 %v1651, %v1650
  %v1691 = vpack.c.b16 %v1653, %v1652
  %v1692 = vpack.c.b16 %v1655, %v1654
  %v1693 = vpack.c.b16 %v1657, %v1656
  %v1694 = vpack.c.b16 %v1659, %v1658
  %v1695 = vpack.c.b16 %v1661, %v1660
  %v1696 = vpack.c.b16 %v1663, %v1662
  %v1697 = vpack.c.b16 %v1665, %v1664
  %1730 = vmatprep.subr.bf16.mxu0 0
  %1731 = vmatpush1.bf16.msra.mxu0 %v1673
  %1732 = vmatprep.subr.bf16.mxu0 0
  %1733 = vmatpush1.bf16.msra.mxu0 %v1672
  %1734 = vmatprep.subr.bf16.mxu0 0
  %1735 = vmatpush1.bf16.msra.mxu0 %v1671
  %1736 = vmatprep.subr.bf16.mxu0 0
  %1737 = vmatpush1.bf16.msra.mxu0 %v1670
  %1738 = vmatprep.subr.bf16.mxu0 0
  %1739 = vmatpush1.bf16.msra.mxu0 %v1669
  %1740 = vmatprep.subr.bf16.mxu0 0
  %1741 = vmatpush1.bf16.msra.mxu0 %v1668
  %1742 = vmatprep.subr.bf16.mxu0 0
  %1743 = vmatpush1.bf16.msra.mxu0 %v1667
  %1744 = vmatprep.subr.bf16.mxu0 0
  %1745 = vmatpush1.bf16.msra.mxu0 %v1666
  %1746 = vmatprep.subr.bf16.mxu0 0
  %1747 = vmatpush2.bf16.msra.mxu0 %v1681
  %1748 = vmatprep.subr.bf16.mxu0 0
  %1749 = vmatpush2.bf16.msra.mxu0 %v1680
  %1750 = vmatprep.subr.bf16.mxu0 0
  %1751 = vmatpush2.bf16.msra.mxu0 %v1679
  %1752 = vmatprep.subr.bf16.mxu0 0
  %1753 = vmatpush2.bf16.msra.mxu0 %v1678
  %1754 = vmatprep.subr.bf16.mxu0 0
  %1755 = vmatpush2.bf16.msra.mxu0 %v1677
  %1756 = vmatprep.subr.bf16.mxu0 0
  %1757 = vmatpush2.bf16.msra.mxu0 %v1676
  %1758 = vmatprep.subr.bf16.mxu0 0
  %1759 = vmatpush2.bf16.msra.mxu0 %v1675
  %1760 = vmatprep.subr.bf16.mxu0 0
  %1761 = vmatpush2.bf16.msra.mxu0 %v1674
  %1762 = vmatprep.mubr.bf16.mxu0 %v1464
  %1763 = vmatmul.mubr.bf16.gmra.mxu0 %v1463
  %v1764 = vpop.f32.mrf.mxu0
  %v1765 = vadd.f32 %v1536, %v1764
  %v1766 = vpop.f32.mrf.mxu0
  %v1767 = vpop.f32.mrf.mxu0
  %v1768 = vpop.f32.mrf.mxu0
  %1769 = vdwg.mxu0
  %1770 = vmatprep.subr.bf16.mxu0 0
  %1771 = vmatpush1.bf16.msra.mxu0 %v1689
  %1772 = vmatprep.subr.bf16.mxu0 0
  %1773 = vmatpush1.bf16.msra.mxu0 %v1688
  %1774 = vmatprep.subr.bf16.mxu0 0
  %1775 = vmatpush1.bf16.msra.mxu0 %v1687
  %1776 = vmatprep.subr.bf16.mxu0 0
  %1777 = vmatpush1.bf16.msra.mxu0 %v1686
  %1778 = vmatprep.subr.bf16.mxu0 0
  %1779 = vmatpush1.bf16.msra.mxu0 %v1685
  %1780 = vmatprep.subr.bf16.mxu0 0
  %1781 = vmatpush1.bf16.msra.mxu0 %v1684
  %1782 = vmatprep.subr.bf16.mxu0 0
  %1783 = vmatpush1.bf16.msra.mxu0 %v1683
  %1784 = vmatprep.subr.bf16.mxu0 0
  %1785 = vmatpush1.bf16.msra.mxu0 %v1682
  %1786 = vmatprep.subr.bf16.mxu0 0
  %1787 = vmatpush2.bf16.msra.mxu0 %v1697
  %1788 = vmatprep.subr.bf16.mxu0 0
  %1789 = vmatpush2.bf16.msra.mxu0 %v1696
  %1790 = vmatprep.subr.bf16.mxu0 0
  %1791 = vmatpush2.bf16.msra.mxu0 %v1695
  %1792 = vmatprep.subr.bf16.mxu0 0
  %1793 = vmatpush2.bf16.msra.mxu0 %v1694
  %1794 = vmatprep.subr.bf16.mxu0 0
  %1795 = vmatpush2.bf16.msra.mxu0 %v1693
  %1796 = vmatprep.subr.bf16.mxu0 0
  %1797 = vmatpush2.bf16.msra.mxu0 %v1692
  %1798 = vmatprep.subr.bf16.mxu0 0
  %1799 = vmatpush2.bf16.msra.mxu0 %v1691
  %1800 = vmatprep.subr.bf16.mxu0 0
  %1801 = vmatpush2.bf16.msra.mxu0 %v1690
  %1802 = vmatprep.mubr.bf16.mxu0 %v1466
  %1803 = vmatmul.mubr.bf16.gmra.mxu0 %v1465
  %v1804 = vpop.f32.mrf.mxu0
  %v1805 = vadd.f32 %v1765, %v1804
  %v1806 = vpop.f32.mrf.mxu0
  %v1807 = vpop.f32.mrf.mxu0
  %v1808 = vpop.f32.mrf.mxu0
  %1809 = vdwg.mxu0
  %vm1810 = vcmp.gt.f32.partialorder %v1805, 0.0
  %v1811 = vmul.f32 %v1805, 0.01
  %v1812 = vsel %vm1810, %v1805, %v1811
  %v1813 = vpack.c.bf16 %v1812, %v1812
  %v1814 = vld [vmem:[%s9] sm:$0xf]
  %v1815 = vld [vmem:[%s9 + $0x4] sm:$0xf]
  %v1816 = vld [vmem:[%s9 + $0x8] sm:$0xf]
  %v1817 = vld [vmem:[%s9 + $0xc] sm:$0xf]
  %v1818 = vld [vmem:[%s9 + $0x10] sm:$0xf]
  %v1819 = vld [vmem:[%s9 + $0x14] sm:$0xf]
  %v1820 = vld [vmem:[%s9 + $0x18] sm:$0xf]
  %v1821 = vld [vmem:[%s9 + $0x1c] sm:$0xf]
  %v1822 = vld [vmem:[%s9 + $0x20] sm:$0xf]
  %v1823 = vld [vmem:[%s9 + $0x24] sm:$0xf]
  %v1824 = vld [vmem:[%s9 + $0x28] sm:$0xf]
  %v1825 = vld [vmem:[%s9 + $0x2c] sm:$0xf]
  %v1826 = vld [vmem:[%s9 + $0x30] sm:$0xf]
  %v1827 = vld [vmem:[%s9 + $0x34] sm:$0xf]
  %v1828 = vld [vmem:[%s9 + $0x38] sm:$0xf]
  %v1829 = vld [vmem:[%s9 + $0x3c] sm:$0xf]
  %v1830 = vld [vmem:[%s10] sm:$0x1]
  %v1832 = vlaneseq
  %v1833 = vshrl.u32 %v1832, 7
  %v1834 = vsub.s32 0, %v1833
  %v1835 = vrot.slane %v1830, %v1834
  %v1853 = vunpack.c.l.b16 %v1814
  %v1854 = vunpack.c.l.b16 %v1815
  %v1855 = vunpack.c.l.b16 %v1816
  %v1856 = vunpack.c.l.b16 %v1817
  %v1857 = vunpack.c.l.b16 %v1818
  %v1858 = vunpack.c.l.b16 %v1819
  %v1859 = vunpack.c.l.b16 %v1820
  %v1860 = vunpack.c.l.b16 %v1821
  %v1861 = vunpack.c.l.b16 %v1822
  %v1862 = vunpack.c.l.b16 %v1823
  %v1863 = vunpack.c.l.b16 %v1824
  %v1864 = vunpack.c.l.b16 %v1825
  %v1865 = vunpack.c.l.b16 %v1826
  %v1866 = vunpack.c.l.b16 %v1827
  %v1867 = vunpack.c.l.b16 %v1828
  %v1868 = vunpack.c.l.b16 %v1829
  %v1869 = vpack.c.b16 %v1854, %v1853
  %v1870 = vpack.c.b16 %v1856, %v1855
  %v1871 = vpack.c.b16 %v1858, %v1857
  %v1872 = vpack.c.b16 %v1860, %v1859
  %v1873 = vpack.c.b16 %v1862, %v1861
  %v1874 = vpack.c.b16 %v1864, %v1863
  %v1875 = vpack.c.b16 %v1866, %v1865
  %v1876 = vpack.c.b16 %v1868, %v1867
  %1885 = vmatprep.subr.bf16.mxu0 0
  %1886 = vmatpush1.bf16.msra.mxu0 %v1876
  %1887 = vmatprep.subr.bf16.mxu0 0
  %1888 = vmatpush1.bf16.msra.mxu0 %v1875
  %1889 = vmatprep.subr.bf16.mxu0 0
  %1890 = vmatpush1.bf16.msra.mxu0 %v1874
  %1891 = vmatprep.subr.bf16.mxu0 0
  %1892 = vmatpush1.bf16.msra.mxu0 %v1873
  %1893 = vmatprep.subr.bf16.mxu0 0
  %1894 = vmatpush1.bf16.msra.mxu0 %v1872
  %1895 = vmatprep.subr.bf16.mxu0 0
  %1896 = vmatpush1.bf16.msra.mxu0 %v1871
  %1897 = vmatprep.subr.bf16.mxu0 0
  %1898 = vmatpush1.bf16.msra.mxu0 %v1870
  %1899 = vmatprep.subr.bf16.mxu0 0
  %1900 = vmatpush1.bf16.msra.mxu0 %v1869
  %1901 = vmatprep.subr.bf16.mxu0 0
  %1902 = vmatpush2.bf16.msra.mxu0 0
  %1903 = vmatprep.subr.bf16.mxu0 0
  %1904 = vmatpush2.bf16.msra.mxu0 0
  %1905 = vmatprep.subr.bf16.mxu0 0
  %1906 = vmatpush2.bf16.msra.mxu0 0
  %1907 = vmatprep.subr.bf16.mxu0 0
  %1908 = vmatpush2.bf16.msra.mxu0 0
  %1909 = vmatprep.subr.bf16.mxu0 0
  %1910 = vmatpush2.bf16.msra.mxu0 0
  %1911 = vmatprep.subr.bf16.mxu0 0
  %1912 = vmatpush2.bf16.msra.mxu0 0
  %1913 = vmatprep.subr.bf16.mxu0 0
  %1914 = vmatpush2.bf16.msra.mxu0 0
  %1915 = vmatprep.subr.bf16.mxu0 0
  %1916 = vmatpush2.bf16.msra.mxu0 0
  %1917 = vmatprep.mubr.bf16.mxu0 0
  %1918 = vmatmul.mubr.bf16.gmra.mxu0 %v1813
  %v1919 = vpop.f32.mrf.mxu0
  %v1920 = vadd.f32 %v1835, %v1919
  %v1921 = vpop.f32.mrf.mxu0
  %v1922 = vpop.f32.mrf.mxu0
  %v1923 = vpop.f32.mrf.mxu0
  %1924 = vdwg.mxu0
  %v1925 = vpack.c.bf16 %v1920, %v1920
  %v1926 = vld [vmem:[%s11] sm:$0x1]
  %v1927 = vld [vmem:[%s12] sm:$0x1]
  %v1929 = vlaneseq
  %v1930 = vshrl.u32 %v1929, 7
  %v1931 = vsub.s32 0, %v1930
  %v1932 = vrot.slane %v1927, %v1931
  %vm1934 = vcmask 15360
  %v1936 = vsel %vm1934, %v1925, 0
  %vm1938 = vcmask 1040384
  %v1940 = vsel %vm1938, %v1926, 0
  %1942 = vmatprep.subr.bf16.mxu0 0
  %1943 = vmatpush1.bf16.msra.mxu0 0
  %1944 = vmatprep.subr.bf16.mxu0 0
  %1945 = vmatpush1.bf16.msra.mxu0 0
  %1946 = vmatprep.subr.bf16.mxu0 0
  %1947 = vmatpush1.bf16.msra.mxu0 0
  %1948 = vmatprep.subr.bf16.mxu0 0
  %1949 = vmatpush1.bf16.msra.mxu0 0
  %1950 = vmatprep.subr.bf16.mxu0 0
  %1951 = vmatpush1.bf16.msra.mxu0 0
  %1952 = vmatprep.subr.bf16.mxu0 0
  %1953 = vmatpush1.bf16.msra.mxu0 0
  %1954 = vmatprep.subr.bf16.mxu0 0
  %1955 = vmatpush1.bf16.msra.mxu0 0
  %1956 = vmatprep.subr.bf16.mxu0 0
  %1957 = vmatpush1.bf16.msra.mxu0 %v1940
  %1958 = vmatprep.subr.bf16.mxu0 0
  %1959 = vmatpush2.bf16.msra.mxu0 0
  %1960 = vmatprep.subr.bf16.mxu0 0
  %1961 = vmatpush2.bf16.msra.mxu0 0
  %1962 = vmatprep.subr.bf16.mxu0 0
  %1963 = vmatpush2.bf16.msra.mxu0 0
  %1964 = vmatprep.subr.bf16.mxu0 0
  %1965 = vmatpush2.bf16.msra.mxu0 0
  %1966 = vmatprep.subr.bf16.mxu0 0
  %1967 = vmatpush2.bf16.msra.mxu0 0
  %1968 = vmatprep.subr.bf16.mxu0 0
  %1969 = vmatpush2.bf16.msra.mxu0 0
  %1970 = vmatprep.subr.bf16.mxu0 0
  %1971 = vmatpush2.bf16.msra.mxu0 0
  %1972 = vmatprep.subr.bf16.mxu0 0
  %1973 = vmatpush2.bf16.msra.mxu0 0
  %1974 = vmatprep.mubr.bf16.mxu0 0
  %1975 = vmatmul.mubr.bf16.gmra.mxu0 %v1936
  %v1976 = vpop.f32.mrf.mxu0
  %v1977 = vadd.f32 %v1932, %v1976
  %v1978 = vpop.f32.mrf.mxu0
  %v1979 = vpop.f32.mrf.mxu0
  %v1980 = vpop.f32.mrf.mxu0
  %1981 = vdwg.mxu0
  %v1982 = vmax.f32 %v1977, 0.0
  %v1983 = vpack.c.bf16 %v1982, %v1982
  %v1984 = vld [vmem:[%s13] sm:$0xf]
  %v1985 = vld [vmem:[%s13 + $0x4] sm:$0xf]
  %v1986 = vld [vmem:[%s13 + $0x8] sm:$0xf]
  %v1987 = vld [vmem:[%s13 + $0xc] sm:$0x7]
  %v1988 = vld [vmem:[#allocation2] sm:$0x1]
  %v1990 = vlaneseq
  %v1991 = vshrl.u32 %v1990, 7
  %v1992 = vsub.s32 0, %v1991
  %v1993 = vrot.slane %v1988, %v1992
  %v1999 = vunpack.c.l.b16 %v1984
  %v2000 = vunpack.c.l.b16 %v1985
  %v2001 = vunpack.c.l.b16 %v1986
  %v2002 = vunpack.c.l.b16 %v1987
  %v2003 = vpack.c.b16 %v2000, %v1999
  %v2004 = vpack.c.b16 %v2002, %v2001
  %vm2006 = vcmask 244736
  %v2008 = vsel %vm2006, %v1983, 0
  %vm2010 = vcmask 1046528
  %v2012 = vsel %vm2010, %v2004, 0
  %2014 = vmatprep.subr.bf16.mxu0 0
  %2015 = vmatpush1.bf16.msra.mxu0 0
  %2016 = vmatprep.subr.bf16.mxu0 0
  %2017 = vmatpush1.bf16.msra.mxu0 0
  %2018 = vmatprep.subr.bf16.mxu0 0
  %2019 = vmatpush1.bf16.msra.mxu0 0
  %2020 = vmatprep.subr.bf16.mxu0 0
  %2021 = vmatpush1.bf16.msra.mxu0 0
  %2022 = vmatprep.subr.bf16.mxu0 0
  %2023 = vmatpush1.bf16.msra.mxu0 0
  %2024 = vmatprep.subr.bf16.mxu0 0
  %2025 = vmatpush1.bf16.msra.mxu0 0
  %2026 = vmatprep.subr.bf16.mxu0 0
  %2027 = vmatpush1.bf16.msra.mxu0 %v2012
  %2028 = vmatprep.subr.bf16.mxu0 0
  %2029 = vmatpush1.bf16.msra.mxu0 %v2003
  %2030 = vmatprep.subr.bf16.mxu0 0
  %2031 = vmatpush2.bf16.msra.mxu0 0
  %2032 = vmatprep.subr.bf16.mxu0 0
  %2033 = vmatpush2.bf16.msra.mxu0 0
  %2034 = vmatprep.subr.bf16.mxu0 0
  %2035 = vmatpush2.bf16.msra.mxu0 0
  %2036 = vmatprep.subr.bf16.mxu0 0
  %2037 = vmatpush2.bf16.msra.mxu0 0
  %2038 = vmatprep.subr.bf16.mxu0 0
  %2039 = vmatpush2.bf16.msra.mxu0 0
  %2040 = vmatprep.subr.bf16.mxu0 0
  %2041 = vmatpush2.bf16.msra.mxu0 0
  %2042 = vmatprep.subr.bf16.mxu0 0
  %2043 = vmatpush2.bf16.msra.mxu0 0
  %2044 = vmatprep.subr.bf16.mxu0 0
  %2045 = vmatpush2.bf16.msra.mxu0 0
  %2046 = vmatprep.mubr.bf16.mxu0 0
  %2047 = vmatmul.mubr.bf16.gmra.mxu0 %v2008
  %v2048 = vpop.f32.mrf.mxu0
  %v2049 = vadd.f32 %v1993, %v2048
  %v2050 = vpop.f32.mrf.mxu0
  %v2051 = vpop.f32.mrf.mxu0
  %v2052 = vpop.f32.mrf.mxu0
  %2053 = vdwg.mxu0
  %vm2054 = vcmask 1024
  %2055 = vst.msk [vmem:[%s15] sm:$0x3] %vm2054, %v2049
  // Predicated region
  $region62: #{cnet_forward.3} parent=0 // pred_check
    _
  $region63: #{cnet_forward.3} parent=0 // pred_check_branch
    %2057 = sbr.rel (0) target = $region65
  $region64: #{cnet_forward.3} parent=0 // pred_region
    _
  $region65: #{cnet_forward.3} parent=0 // pred_fallthru
    _
  // Predicated region
  $region66: #{cnet_forward.3} parent=0 // pred_check
    _
  $region67: #{cnet_forward.3} parent=0 // pred_check_branch
    %2059 = sbr.rel (0) target = $region69
  $region68: #{cnet_forward.3} parent=0 // pred_region
    _
  $region69: #{cnet_forward.3} parent=0 // pred_fallthru
    _

</llo_original>
